<compile_context>
chip_gen: v7x
topology: tpu7x:2x2x1
jax: 0.10.0
libtpu: 0.0.40
codegen_flags: <defaults>
</compile_context>

<pallas_src>
import functools

import numpy as np

import jax
import jax.numpy as jnp
from jax.experimental import pallas as pl
from jax.experimental.pallas import tpu as pltpu


# Residual-block application order (RB5 is intentionally applied twice,
# matching the PyTorch forward: x6 = RB5(x5); x7 = RB5(x6)).
_BLOCK_ORDER = ["RB1", "RB2", "RB3", "RB4", "RB5", "RB5", "RB6", "RB7", "RB8"]

# 3x3 tap order: tap index = (dy+1)*3 + (dx+1), matching _conv_w_to_mat.
_TAP_OFFS = tuple((dy, dx) for dy in (-1, 0, 1) for dx in (-1, 0, 1))


# ----------------------------------------------------------------------------
# Fused whole-network kernel (one batch element per grid step).
# ----------------------------------------------------------------------------
def _srgan_fused_kernel(x_ref, alphas_ref,
                        w1_ref, b1_ref, wrb_ref, brb_ref,
                        wm_ref, bm_ref, wp_ref, bp_ref,
                        wfin_ref, bfin_ref, o_ref, *, H, W):
    HW = H * W
    f32 = jnp.float32

    # Tap-validity masks (shared by every conv at this resolution), built once.
    pos = jax.lax.broadcasted_iota(jnp.int32, (1, HW), 1)
    col = pos % W
    dx_mask = {-1: col > 0, 0: None, 1: col < W - 1}           # left/right edge
    dy_mask = {-1: pos >= W, 0: None, 1: pos < HW - W}         # top/bottom edge
    tap_masks = []
    for dy, dx in _TAP_OFFS:
        my, mx = dy_mask[dy], dx_mask[dx]
        if my is None:
            tap_masks.append(mx)
        elif mx is None:
            tap_masks.append(my)
        else:
            tap_masks.append(jnp.logical_and(my, mx))

    def conv3x3(x, wmat, bias, alpha=None):
        # x: (Cin, H*W) f32; wmat: (Cout, K >= 9*Cin); bias: (Cout, 1).
        # Taps are XLU lane rotations of x + edge masks: no padded-copy temp,
        # no lane-unaligned slices.
        cin = x.shape[0]
        taps = []
        for (dy, dx), msk in zip(_TAP_OFFS, tap_masks):
            off = dy * W + dx
            t = x if off == 0 else pltpu.roll(x, (-off) % HW, axis=1)
            if msk is not None:
                t = jnp.where(msk, t, 0.0)
            taps.append(t)
        k = wmat.shape[1]
        if k > 9 * cin:                      # first conv: K padded 9 -> 16
            taps.append(jnp.zeros((k - 9 * cin, HW), f32))
        im = jnp.concatenate(taps, axis=0)   # (K, HW) im2col slab
        # Deliberate f32 MXU operands (see header comment re: bf16 accuracy).
        acc = jax.lax.dot_general(wmat, im, (((1,), (0,)), ((), ())),
                                  preferred_element_type=f32)
        acc = acc + bias                     # (Cout, 1) broadcast along lanes
        if alpha is not None:
            acc = jnp.where(acc >= 0, acc, alpha * acc)        # PReLU
        return acc

    x = x_ref[0].astype(f32)                                   # (Cin, HW)
    x1 = conv3x3(x, w1_ref[...], b1_ref[...], alphas_ref[0])

    # 9 residual-block applications via fori_loop (weights pre-stacked per
    # application, so the loop index selects wrb_ref[i]).
    def rb_body(i, h):
        y = conv3x3(h, wrb_ref[i, 0], brb_ref[i, 0], alphas_ref[1 + i])
        return conv3x3(y, wrb_ref[i, 1], brb_ref[i, 1]) + h

    h = jax.lax.fori_loop(0, len(_BLOCK_ORDER), rb_body, x1)

    x11 = conv3x3(h + x1, wm_ref[...], bm_ref[...], alphas_ref[10])
    # PS2 conv + PReLU (scalar slope commutes with the pixel shuffle).
    x12 = conv3x3(x11, wp_ref[...], bp_ref[...], alphas_ref[11])
    # Final 3x3 conv fused with the pixel shuffle: 4 HR sub-pixel phase planes
    # computed directly on the low-res 32-channel activation.
    phases = conv3x3(x12, wfin_ref[...], bfin_ref[...])        # (4, HW)
    o_ref[0] = phases.astype(o_ref.dtype)


# ----------------------------------------------------------------------------
# Weight reshaping helpers (run in plain JAX at trace time, tiny arrays).
# ----------------------------------------------------------------------------
def _conv_w_to_mat(w):
    # (3, 3, Cin, Cout) HWIO -> (Cout, 9*Cin), tap-major / channel-minor,
    # matching the in-kernel im2col row ordering.
    kh, kw, cin, cout = w.shape
    return jnp.transpose(w, (3, 0, 1, 2)).reshape(cout, kh * kw * cin)


def _final_phase_weights(w_fin, b_fin, feat, r=2):
    """Fold PixelShuffle(r) + final 3x3 conv into per-phase im2col weights.

    For output phase (io, jo): HR tap (dy, dx) hits HR pixel (2ho+io+dy-1,
    2wo+jo+dx-1) which lives at LR offset (floor(a/2), floor(b/2)) and LR
    channel c*r*r + (a%2)*r + (b%2), with a = io+dy-1, b = jo+dx-1.  The LR
    zero padding by 1 used by conv3x3 reproduces HR zero padding exactly.
    """
    cin_lr = feat * r * r
    zero_slot = 3 * 3 * feat                      # index of appended 0 weight
    idx = np.full((r * r, 9 * cin_lr), zero_slot, dtype=np.int32)
    for io in range(r):
        for jo in range(r):
            q = io * r + jo
            for dy in range(3):
                a = io + dy - 1
                ta, ia = a // 2 + 1, a % 2        # LR tap row index, row phase
                for dx in range(3):
                    b = jo + dx - 1
                    tb, jb = b // 2 + 1, b % 2    # LR tap col index, col phase
                    for c in range(feat):
                        k = c * r * r + ia * r + jb          # LR channel
                        col = (ta * 3 + tb) * cin_lr + k
                        idx[q, col] = (dy * 3 + dx) * feat + c
    w_flat = jnp.concatenate(
        [w_fin.reshape(-1).astype(jnp.float32), jnp.zeros((1,), jnp.float32)])
    w_mat = w_flat[jnp.asarray(idx)]                         # (r*r, 9*cin_lr)
    b_vec = jnp.broadcast_to(
        jnp.asarray(b_fin, jnp.float32).reshape(1, 1), (r * r, 1))
    return w_mat, b_vec


# ----------------------------------------------------------------------------
# Forward pass (NCHW in / NCHW out, scale=2 branch).
# ----------------------------------------------------------------------------
def srgan_forward_pallas(x_nchw, params):
    N, cin, H, W = x_nchw.shape
    HW = H * W

    w0, b0, a0 = params["first"]
    feat = w0.shape[-1]

    # First conv: pad K from 9*cin up to a multiple of 8 (sublane tile).
    w1 = _conv_w_to_mat(w0)
    k_first = 9 * cin
    k_pad = -(-k_first // 8) * 8
    if k_pad != k_first:
        w1 = jnp.concatenate(
            [w1, jnp.zeros((feat, k_pad - k_first), jnp.float32)], axis=1)
    b1 = jnp.asarray(b0, jnp.float32).reshape(feat, 1)

    # Residual-block weights stacked per APPLICATION (RB5 duplicated) so the
    # kernel's fori_loop indexes them with the loop counter.
    wrb = jnp.stack([
        jnp.stack([_conv_w_to_mat(params[name][0]),
                   _conv_w_to_mat(params[name][3])], axis=0)
        for name in _BLOCK_ORDER], axis=0)                   # (9, 2, F, 9F)
    brb = jnp.stack([
        jnp.stack([params[name][1].reshape(feat, 1),
                   params[name][4].reshape(feat, 1)], axis=0)
        for name in _BLOCK_ORDER], axis=0)                   # (9, 2, F, 1)

    wm_, bm_, am = params["mid"]
    wm = _conv_w_to_mat(wm_)
    bm = bm_.reshape(-1, 1)
    wp_, bp_, ap = params["ps2"]
    wp = _conv_w_to_mat(wp_)
    bp = bp_.reshape(-1, 1)
    wfin, bfin = _final_phase_weights(*params["final"], feat=feat, r=2)

    alphas = jnp.stack(
        [jnp.asarray(a0, jnp.float32)]
        + [jnp.asarray(params[name][2], jnp.float32) for name in _BLOCK_ORDER]
        + [jnp.asarray(am, jnp.float32), jnp.asarray(ap, jnp.float32)])  # (12,)

    # NCHW -> (N, C, H*W): pure reshape, channels on sublanes, spatial on lanes.
    x_flat = x_nchw.reshape(N, cin, HW).astype(jnp.float32)

    kernel = functools.partial(_srgan_fused_kernel, H=H, W=W)
    phases = pl.pallas_call(
        kernel,
        out_shape=jax.ShapeDtypeStruct((N, 4, HW), jnp.float32),
        grid=(N,),
        in_specs=[
            pl.BlockSpec((1, cin, HW), lambda n: (n, 0, 0)),
            pl.BlockSpec(memory_space=pltpu.MemorySpace.SMEM),   # PReLU alphas
            pl.BlockSpec(w1.shape, lambda n: (0, 0)),
            pl.BlockSpec(b1.shape, lambda n: (0, 0)),
            pl.BlockSpec(wrb.shape, lambda n: (0, 0, 0, 0)),
            pl.BlockSpec(brb.shape, lambda n: (0, 0, 0, 0)),
            pl.BlockSpec(wm.shape, lambda n: (0, 0)),
            pl.BlockSpec(bm.shape, lambda n: (0, 0)),
            pl.BlockSpec(wp.shape, lambda n: (0, 0)),
            pl.BlockSpec(bp.shape, lambda n: (0, 0)),
            pl.BlockSpec(wfin.shape, lambda n: (0, 0)),
            pl.BlockSpec(bfin.shape, lambda n: (0, 0)),
        ],
        out_specs=pl.BlockSpec((1, 4, HW), lambda n: (n, 0, 0)),
        compiler_params=pltpu.CompilerParams(
            dimension_semantics=("parallel",)),
    )(x_flat, alphas, w1, b1, wrb, brb, wm, bm, wp, bp, wfin, bfin)

    # (N, 4, H*W) phase planes -> (N, 1, 2H, 2W): 2x2 sub-pixel interleave
    # (pure output formatting on ~8 KB, left in JAX).
    y = phases.reshape(N, 2, 2, H, W)                        # (n, io, jo, h, w)
    y = jnp.transpose(y, (0, 3, 1, 4, 2))                    # (n, h, io, w, jo)
    return y.reshape(N, 1, 2 * H, 2 * W)


# ----------------------------------------------------------------------------
# Deterministic synthetic parameters (scale=2 SrganGenerator).
# ----------------------------------------------------------------------------
def _init_conv(key, cin, cout):
    kw, kb = jax.random.split(key)
    scale = 1.0 / (9.0 * cin) ** 0.5
    w = jax.random.normal(kw, (3, 3, cin, cout), jnp.float32) * scale
    b = jax.random.normal(kb, (cout,), jnp.float32) * 0.01
    return w, b


def make_params(key, in_channels, features):
    keys = iter(jax.random.split(key, 32))
    alpha0 = jnp.float32(0.25)  # PyTorch nn.PReLU default init
    p = {}
    w, b = _init_conv(next(keys), in_channels, features)
    p["first"] = (w, b, alpha0)
    for i in range(1, 9):
        w1, b1 = _init_conv(next(keys), features, features)
        w2, b2 = _init_conv(next(keys), features, features)
        p[f"RB{i}"] = (w1, b1, alpha0, w2, b2)
    w, b = _init_conv(next(keys), features, features * 2)      # mid (scale=2)
    p["mid"] = (w, b, alpha0)
    w, b = _init_conv(next(keys), features * 2, features * 4)  # PS2 conv
    p["ps2"] = (w, b, alpha0)
    w, b = _init_conv(next(keys), features, 1)                 # final layer
    p["final"] = (w, b)
    return p


# ----------------------------------------------------------------------------
# Pure-JAX reference (mirrors the PyTorch forward exactly).
# ----------------------------------------------------------------------------
def pixel_shuffle_nhwc(x, r):
    N, H, W, Cr2 = x.shape
    C = Cr2 // (r * r)
    y = x.reshape(N, H, W, C, r, r)
    y = jnp.transpose(y, (0, 1, 4, 2, 5, 3))   # (N, H, r, W, r, C)
    return y.reshape(N, H * r, W * r, C)


def _ref_conv(x, w, b):
    y = jax.lax.conv_general_dilated(
        x, w, window_strides=(1, 1), padding="SAME",
        dimension_numbers=("NHWC", "HWIO", "NHWC"),
        precision=jax.lax.Precision.HIGHEST)
    return y + b[None, None, None, :]


def _ref_prelu(x, a):
    return jnp.where(x >= 0, x, a * x)


def srgan_forward_ref(x_nchw, params):
    x = jnp.transpose(x_nchw, (0, 2, 3, 1))
    w, b, a = params["first"]
    x1 = _ref_prelu(_ref_conv(x, w, b), a)
    h = x1
    for name in _BLOCK_ORDER:
        w1, b1, a1, w2, b2 = params[name]
        y = _ref_prelu(_ref_conv(h, w1, b1), a1)
        h = _ref_conv(y, w2, b2) + h
    w, b, a = params["mid"]
    x11 = _ref_prelu(_ref_conv(h + x1, w, b), a)
    w, b, a = params["ps2"]
    x13 = _ref_prelu(pixel_shuffle_nhwc(_ref_conv(x11, w, b), 2), a)
    w, b = params["final"]
    out = _ref_conv(x13, w, b)
    return jnp.transpose(out, (0, 3, 1, 2))


if __name__ == "__main__":
    key = jax.random.PRNGKey(0)
    kp, kx = jax.random.split(key)

    N, CIN, H, W = 2, 1, 16, 16
    FEATURES, SCALE = 8, 2

    params = make_params(kp, CIN, FEATURES)
    x = jax.random.normal(kx, (N, CIN, H, W), jnp.float32)

    out = jax.jit(srgan_forward_pallas)(x, params)
    out = jax.block_until_ready(out)
    assert out.shape == (N, 1, H * SCALE, W * SCALE), out.shape

    ref = srgan_forward_ref(x, params)
    if not jnp.allclose(out, ref, rtol=1e-2, atol=1e-2):
        err = float(jnp.max(jnp.abs(out - ref)))
        raise AssertionError(
            f"Pallas output does not match JAX reference (max abs err {err})")

    print("KERNEL_OK")
</pallas_src>

<mosaic_0001>
module attributes {stable_mosaic.version = 11 : i64} {
  func.func @_srgan_fused_kernel(%arg0: i32, %arg1: memref<1x1x256xf32, #tpu.memory_space<vmem>>, %arg2: memref<12xf32, #tpu.memory_space<smem>>, %arg3: memref<8x16xf32, #tpu.memory_space<vmem>>, %arg4: memref<8x1xf32, #tpu.memory_space<vmem>>, %arg5: memref<9x2x8x72xf32, #tpu.memory_space<vmem>>, %arg6: memref<9x2x8x1xf32, #tpu.memory_space<vmem>>, %arg7: memref<16x72xf32, #tpu.memory_space<vmem>>, %arg8: memref<16x1xf32, #tpu.memory_space<vmem>>, %arg9: memref<32x144xf32, #tpu.memory_space<vmem>>, %arg10: memref<32x1xf32, #tpu.memory_space<vmem>>, %arg11: memref<4x288xf32, #tpu.memory_space<vmem>>, %arg12: memref<4x1xf32, #tpu.memory_space<vmem>>, %arg13: memref<1x4x256xf32, #tpu.memory_space<vmem>>) attributes {dimension_semantics = [#tpu.dimension_semantics<parallel>], iteration_bounds = array<i64: 2>, scalar_prefetch = 0 : i64, scratch_operands = 0 : i64, tpu.core_type = #tpu.core_type<tc>, window_params = [{transform_indices = @transform_0, window_bounds = array<i64: 1, 1, 256>}, {transform_indices = @transform_1, window_bounds = array<i64: 12>}, {pipeline_mode = #tpu.pipeline_mode<synchronous>, transform_indices = @transform_2, window_bounds = array<i64: 8, 16>}, {pipeline_mode = #tpu.pipeline_mode<synchronous>, transform_indices = @transform_3, window_bounds = array<i64: 8, 1>}, {pipeline_mode = #tpu.pipeline_mode<synchronous>, transform_indices = @transform_4, window_bounds = array<i64: 9, 2, 8, 72>}, {pipeline_mode = #tpu.pipeline_mode<synchronous>, transform_indices = @transform_5, window_bounds = array<i64: 9, 2, 8, 1>}, {pipeline_mode = #tpu.pipeline_mode<synchronous>, transform_indices = @transform_6, window_bounds = array<i64: 16, 72>}, {pipeline_mode = #tpu.pipeline_mode<synchronous>, transform_indices = @transform_7, window_bounds = array<i64: 16, 1>}, {pipeline_mode = #tpu.pipeline_mode<synchronous>, transform_indices = @transform_8, window_bounds = array<i64: 32, 144>}, {pipeline_mode = #tpu.pipeline_mode<synchronous>, transform_indices = @transform_9, window_bounds = array<i64: 32, 1>}, {pipeline_mode = #tpu.pipeline_mode<synchronous>, transform_indices = @transform_10, window_bounds = array<i64: 4, 288>}, {pipeline_mode = #tpu.pipeline_mode<synchronous>, transform_indices = @transform_11, window_bounds = array<i64: 4, 1>}, {transform_indices = @transform_12, window_bounds = array<i64: 1, 4, 256>}]} {
    %0 = tpu.iota {dimensions = array<i32: 1>} : vector<1x256xi32>
    %c16_i32 = arith.constant 16 : i32
    %c0_i32 = arith.constant 0 : i32
    %1 = arith.cmpi eq, %c16_i32, %c0_i32 : i32
    %c1_i32 = arith.constant 1 : i32
    %2 = arith.select %1, %c1_i32, %c16_i32 : i32
    %3 = vector.broadcast %2 : i32 to vector<1x256xi32>
    %4 = arith.remsi %0, %3 : vector<1x256xi32>
    %c0_i32_0 = arith.constant 0 : i32
    %5 = vector.broadcast %c0_i32_0 : i32 to vector<1x256xi32>
    %6 = arith.cmpi ne, %4, %5 : vector<1x256xi32>
    %c0_i32_1 = arith.constant 0 : i32
    %7 = vector.broadcast %c0_i32_1 : i32 to vector<1x256xi32>
    %8 = arith.cmpi slt, %4, %7 : vector<1x256xi32>
    %c0_i32_2 = arith.constant 0 : i32
    %9 = arith.cmpi slt, %2, %c0_i32_2 : i32
    %10 = vector.broadcast %9 : i1 to vector<1x256xi1>
    %11 = vector.broadcast %10 : vector<1x256xi1> to vector<1x256xi1>
    %12 = arith.xori %8, %11 : vector<1x256xi1>
    %13 = arith.andi %12, %6 : vector<1x256xi1>
    %14 = vector.broadcast %2 : i32 to vector<1x256xi32>
    %15 = arith.addi %4, %14 : vector<1x256xi32>
    %16 = arith.select %13, %15, %4 : vector<1x256xi1>, vector<1x256xi32>
    %c0_i32_3 = arith.constant 0 : i32
    %17 = vector.broadcast %c0_i32_3 : i32 to vector<1x256xi32>
    %18 = arith.cmpi sgt, %16, %17 : vector<1x256xi32>
    %c15_i32 = arith.constant 15 : i32
    %19 = vector.broadcast %c15_i32 : i32 to vector<1x256xi32>
    %20 = arith.cmpi slt, %16, %19 : vector<1x256xi32>
    %c16_i32_4 = arith.constant 16 : i32
    %21 = vector.broadcast %c16_i32_4 : i32 to vector<1x256xi32>
    %22 = arith.cmpi sge, %0, %21 : vector<1x256xi32>
    %c240_i32 = arith.constant 240 : i32
    %23 = vector.broadcast %c240_i32 : i32 to vector<1x256xi32>
    %24 = arith.cmpi slt, %0, %23 : vector<1x256xi32>
    %25 = arith.andi %22, %18 : vector<1x256xi1>
    %26 = arith.andi %22, %20 : vector<1x256xi1>
    %27 = arith.andi %24, %18 : vector<1x256xi1>
    %28 = arith.andi %24, %20 : vector<1x256xi1>
    %c0 = arith.constant 0 : index
    %c0_5 = arith.constant 0 : index
    %c0_6 = arith.constant 0 : index
    %29 = vector.load %arg1[%c0, %c0_5, %c0_6] : memref<1x1x256xf32, #tpu.memory_space<vmem>>, vector<1x1x256xf32>
    %30 = vector.shape_cast %29 : vector<1x1x256xf32> to vector<1x256xf32>
    %c0_7 = arith.constant 0 : index
    %c0_8 = arith.constant 0 : index
    %31 = vector.load %arg3[%c0_7, %c0_8] : memref<8x16xf32, #tpu.memory_space<vmem>>, vector<8x16xf32>
    %c0_9 = arith.constant 0 : index
    %c0_10 = arith.constant 0 : index
    %32 = vector.load %arg4[%c0_9, %c0_10] : memref<8x1xf32, #tpu.memory_space<vmem>>, vector<8x1xf32>
    %c0_11 = arith.constant 0 : index
    %33 = memref.load %arg2[%c0_11] : memref<12xf32, #tpu.memory_space<smem>>
    %c17_i32 = arith.constant 17 : i32
    %34 = tpu.dynamic_rotate %30 by %c17_i32 dim 1 : vector<1x256xf32>, i32 -> vector<1x256xf32>
    %cst = arith.constant 0.000000e+00 : f32
    %35 = vector.broadcast %cst : f32 to vector<1x256xf32>
    %36 = arith.select %25, %34, %35 : vector<1x256xi1>, vector<1x256xf32>
    %c16_i32_12 = arith.constant 16 : i32
    %37 = tpu.dynamic_rotate %30 by %c16_i32_12 dim 1 : vector<1x256xf32>, i32 -> vector<1x256xf32>
    %cst_13 = arith.constant 0.000000e+00 : f32
    %38 = vector.broadcast %cst_13 : f32 to vector<1x256xf32>
    %39 = arith.select %22, %37, %38 : vector<1x256xi1>, vector<1x256xf32>
    %c15_i32_14 = arith.constant 15 : i32
    %40 = tpu.dynamic_rotate %30 by %c15_i32_14 dim 1 : vector<1x256xf32>, i32 -> vector<1x256xf32>
    %cst_15 = arith.constant 0.000000e+00 : f32
    %41 = vector.broadcast %cst_15 : f32 to vector<1x256xf32>
    %42 = arith.select %26, %40, %41 : vector<1x256xi1>, vector<1x256xf32>
    %c1_i32_16 = arith.constant 1 : i32
    %43 = tpu.dynamic_rotate %30 by %c1_i32_16 dim 1 : vector<1x256xf32>, i32 -> vector<1x256xf32>
    %cst_17 = arith.constant 0.000000e+00 : f32
    %44 = vector.broadcast %cst_17 : f32 to vector<1x256xf32>
    %45 = arith.select %18, %43, %44 : vector<1x256xi1>, vector<1x256xf32>
    %c255_i32 = arith.constant 255 : i32
    %46 = tpu.dynamic_rotate %30 by %c255_i32 dim 1 : vector<1x256xf32>, i32 -> vector<1x256xf32>
    %cst_18 = arith.constant 0.000000e+00 : f32
    %47 = vector.broadcast %cst_18 : f32 to vector<1x256xf32>
    %48 = arith.select %20, %46, %47 : vector<1x256xi1>, vector<1x256xf32>
    %c241_i32 = arith.constant 241 : i32
    %49 = tpu.dynamic_rotate %30 by %c241_i32 dim 1 : vector<1x256xf32>, i32 -> vector<1x256xf32>
    %cst_19 = arith.constant 0.000000e+00 : f32
    %50 = vector.broadcast %cst_19 : f32 to vector<1x256xf32>
    %51 = arith.select %27, %49, %50 : vector<1x256xi1>, vector<1x256xf32>
    %c240_i32_20 = arith.constant 240 : i32
    %52 = tpu.dynamic_rotate %30 by %c240_i32_20 dim 1 : vector<1x256xf32>, i32 -> vector<1x256xf32>
    %cst_21 = arith.constant 0.000000e+00 : f32
    %53 = vector.broadcast %cst_21 : f32 to vector<1x256xf32>
    %54 = arith.select %24, %52, %53 : vector<1x256xi1>, vector<1x256xf32>
    %c239_i32 = arith.constant 239 : i32
    %55 = tpu.dynamic_rotate %30 by %c239_i32 dim 1 : vector<1x256xf32>, i32 -> vector<1x256xf32>
    %cst_22 = arith.constant 0.000000e+00 : f32
    %56 = vector.broadcast %cst_22 : f32 to vector<1x256xf32>
    %57 = arith.select %28, %55, %56 : vector<1x256xi1>, vector<1x256xf32>
    %cst_23 = arith.constant 0.000000e+00 : f32
    %58 = vector.broadcast %cst_23 : f32 to vector<7x256xf32>
    %59 = tpu.concatenate %36, %39, %42, %45, %30, %48, %51, %54, %57, %58 in 0 : vector<1x256xf32>, vector<1x256xf32>, vector<1x256xf32>, vector<1x256xf32>, vector<1x256xf32>, vector<1x256xf32>, vector<1x256xf32>, vector<1x256xf32>, vector<1x256xf32>, vector<7x256xf32> -> vector<16x256xf32>
    %cst_24 = arith.constant dense<0.000000e+00> : vector<8x256xf32>
    %60 = tpu.matmul %31, %59, %cst_24 {dimension_numbers = #tpu.dot_dimension_numbers<[1], [0], [0], [1], [0, 0, 1, 1], [], []>} : vector<8x16xf32>, vector<16x256xf32>, vector<8x256xf32> -> vector<8x256xf32>
    %61 = vector.broadcast %32 : vector<8x1xf32> to vector<8x256xf32>
    %62 = arith.addf %60, %61 : vector<8x256xf32>
    %cst_25 = arith.constant 0.000000e+00 : f32
    %63 = vector.broadcast %cst_25 : f32 to vector<8x256xf32>
    %64 = arith.cmpf oge, %62, %63 : vector<8x256xf32>
    %65 = vector.broadcast %33 : f32 to vector<8x256xf32>
    %66 = arith.mulf %65, %62 : vector<8x256xf32>
    %67 = arith.select %64, %62, %66 : vector<8x256xi1>, vector<8x256xf32>
    %c0_i32_26 = arith.constant 0 : i32
    %c9_i32 = arith.constant 9 : i32
    %68 = arith.addi %c0_i32_26, %c9_i32 : i32
    %c1_i32_27 = arith.constant 1 : i32
    %69 = scf.for %arg14 = %c0_i32_26 to %68 step %c1_i32_27 iter_args(%arg15 = %67) -> (vector<8x256xf32>)  : i32 {
      %224 = arith.index_cast %arg14 : i32 to index
      %c0_97 = arith.constant 0 : index
      %c0_98 = arith.constant 0 : index
      %c0_99 = arith.constant 0 : index
      %225 = vector.load %arg5[%224, %c0_97, %c0_98, %c0_99] : memref<9x2x8x72xf32, #tpu.memory_space<vmem>>, vector<1x1x8x72xf32>
      %226 = vector.shape_cast %225 : vector<1x1x8x72xf32> to vector<8x72xf32>
      %227 = arith.index_cast %arg14 : i32 to index
      %c0_100 = arith.constant 0 : index
      %c0_101 = arith.constant 0 : index
      %c0_102 = arith.constant 0 : index
      %228 = vector.load %arg6[%227, %c0_100, %c0_101, %c0_102] : memref<9x2x8x1xf32, #tpu.memory_space<vmem>>, vector<1x1x8x1xf32>
      %229 = vector.shape_cast %228 : vector<1x1x8x1xf32> to vector<8x1xf32>
      %c1_i32_103 = arith.constant 1 : i32
      %230 = arith.addi %c1_i32_103, %arg14 : i32
      %231 = arith.index_cast %230 : i32 to index
      %232 = memref.load %arg2[%231] : memref<12xf32, #tpu.memory_space<smem>>
      %c17_i32_104 = arith.constant 17 : i32
      %233 = tpu.dynamic_rotate %arg15 by %c17_i32_104 dim 1 : vector<8x256xf32>, i32 -> vector<8x256xf32>
      %cst_105 = arith.constant 0.000000e+00 : f32
      %234 = vector.shape_cast %25 : vector<1x256xi1> to vector<1x256xi1>
      %235 = vector.broadcast %234 : vector<1x256xi1> to vector<8x256xi1>
      %236 = vector.broadcast %cst_105 : f32 to vector<8x256xf32>
      %237 = arith.select %235, %233, %236 : vector<8x256xi1>, vector<8x256xf32>
      %c16_i32_106 = arith.constant 16 : i32
      %238 = tpu.dynamic_rotate %arg15 by %c16_i32_106 dim 1 : vector<8x256xf32>, i32 -> vector<8x256xf32>
      %cst_107 = arith.constant 0.000000e+00 : f32
      %239 = vector.shape_cast %22 : vector<1x256xi1> to vector<1x256xi1>
      %240 = vector.broadcast %239 : vector<1x256xi1> to vector<8x256xi1>
      %241 = vector.broadcast %cst_107 : f32 to vector<8x256xf32>
      %242 = arith.select %240, %238, %241 : vector<8x256xi1>, vector<8x256xf32>
      %c15_i32_108 = arith.constant 15 : i32
      %243 = tpu.dynamic_rotate %arg15 by %c15_i32_108 dim 1 : vector<8x256xf32>, i32 -> vector<8x256xf32>
      %cst_109 = arith.constant 0.000000e+00 : f32
      %244 = vector.shape_cast %26 : vector<1x256xi1> to vector<1x256xi1>
      %245 = vector.broadcast %244 : vector<1x256xi1> to vector<8x256xi1>
      %246 = vector.broadcast %cst_109 : f32 to vector<8x256xf32>
      %247 = arith.select %245, %243, %246 : vector<8x256xi1>, vector<8x256xf32>
      %c1_i32_110 = arith.constant 1 : i32
      %248 = tpu.dynamic_rotate %arg15 by %c1_i32_110 dim 1 : vector<8x256xf32>, i32 -> vector<8x256xf32>
      %cst_111 = arith.constant 0.000000e+00 : f32
      %249 = vector.shape_cast %18 : vector<1x256xi1> to vector<1x256xi1>
      %250 = vector.broadcast %249 : vector<1x256xi1> to vector<8x256xi1>
      %251 = vector.broadcast %cst_111 : f32 to vector<8x256xf32>
      %252 = arith.select %250, %248, %251 : vector<8x256xi1>, vector<8x256xf32>
      %c255_i32_112 = arith.constant 255 : i32
      %253 = tpu.dynamic_rotate %arg15 by %c255_i32_112 dim 1 : vector<8x256xf32>, i32 -> vector<8x256xf32>
      %cst_113 = arith.constant 0.000000e+00 : f32
      %254 = vector.shape_cast %20 : vector<1x256xi1> to vector<1x256xi1>
      %255 = vector.broadcast %254 : vector<1x256xi1> to vector<8x256xi1>
      %256 = vector.broadcast %cst_113 : f32 to vector<8x256xf32>
      %257 = arith.select %255, %253, %256 : vector<8x256xi1>, vector<8x256xf32>
      %c241_i32_114 = arith.constant 241 : i32
      %258 = tpu.dynamic_rotate %arg15 by %c241_i32_114 dim 1 : vector<8x256xf32>, i32 -> vector<8x256xf32>
      %cst_115 = arith.constant 0.000000e+00 : f32
      %259 = vector.shape_cast %27 : vector<1x256xi1> to vector<1x256xi1>
      %260 = vector.broadcast %259 : vector<1x256xi1> to vector<8x256xi1>
      %261 = vector.broadcast %cst_115 : f32 to vector<8x256xf32>
      %262 = arith.select %260, %258, %261 : vector<8x256xi1>, vector<8x256xf32>
      %c240_i32_116 = arith.constant 240 : i32
      %263 = tpu.dynamic_rotate %arg15 by %c240_i32_116 dim 1 : vector<8x256xf32>, i32 -> vector<8x256xf32>
      %cst_117 = arith.constant 0.000000e+00 : f32
      %264 = vector.shape_cast %24 : vector<1x256xi1> to vector<1x256xi1>
      %265 = vector.broadcast %264 : vector<1x256xi1> to vector<8x256xi1>
      %266 = vector.broadcast %cst_117 : f32 to vector<8x256xf32>
      %267 = arith.select %265, %263, %266 : vector<8x256xi1>, vector<8x256xf32>
      %c239_i32_118 = arith.constant 239 : i32
      %268 = tpu.dynamic_rotate %arg15 by %c239_i32_118 dim 1 : vector<8x256xf32>, i32 -> vector<8x256xf32>
      %cst_119 = arith.constant 0.000000e+00 : f32
      %269 = vector.shape_cast %28 : vector<1x256xi1> to vector<1x256xi1>
      %270 = vector.broadcast %269 : vector<1x256xi1> to vector<8x256xi1>
      %271 = vector.broadcast %cst_119 : f32 to vector<8x256xf32>
      %272 = arith.select %270, %268, %271 : vector<8x256xi1>, vector<8x256xf32>
      %273 = tpu.concatenate %237, %242, %247, %252, %arg15, %257, %262, %267, %272 in 0 : vector<8x256xf32>, vector<8x256xf32>, vector<8x256xf32>, vector<8x256xf32>, vector<8x256xf32>, vector<8x256xf32>, vector<8x256xf32>, vector<8x256xf32>, vector<8x256xf32> -> vector<72x256xf32>
      %cst_120 = arith.constant dense<0.000000e+00> : vector<8x256xf32>
      %274 = tpu.matmul %226, %273, %cst_120 {dimension_numbers = #tpu.dot_dimension_numbers<[1], [0], [0], [1], [0, 0, 1, 1], [], []>} : vector<8x72xf32>, vector<72x256xf32>, vector<8x256xf32> -> vector<8x256xf32>
      %275 = vector.broadcast %229 : vector<8x1xf32> to vector<8x256xf32>
      %276 = arith.addf %274, %275 : vector<8x256xf32>
      %cst_121 = arith.constant 0.000000e+00 : f32
      %277 = vector.broadcast %cst_121 : f32 to vector<8x256xf32>
      %278 = arith.cmpf oge, %276, %277 : vector<8x256xf32>
      %279 = vector.broadcast %232 : f32 to vector<8x256xf32>
      %280 = arith.mulf %279, %276 : vector<8x256xf32>
      %281 = arith.select %278, %276, %280 : vector<8x256xi1>, vector<8x256xf32>
      %282 = arith.index_cast %arg14 : i32 to index
      %c1 = arith.constant 1 : index
      %c0_122 = arith.constant 0 : index
      %c0_123 = arith.constant 0 : index
      %283 = vector.load %arg5[%282, %c1, %c0_122, %c0_123] : memref<9x2x8x72xf32, #tpu.memory_space<vmem>>, vector<1x1x8x72xf32>
      %284 = vector.shape_cast %283 : vector<1x1x8x72xf32> to vector<8x72xf32>
      %285 = arith.index_cast %arg14 : i32 to index
      %c1_124 = arith.constant 1 : index
      %c0_125 = arith.constant 0 : index
      %c0_126 = arith.constant 0 : index
      %286 = vector.load %arg6[%285, %c1_124, %c0_125, %c0_126] : memref<9x2x8x1xf32, #tpu.memory_space<vmem>>, vector<1x1x8x1xf32>
      %287 = vector.shape_cast %286 : vector<1x1x8x1xf32> to vector<8x1xf32>
      %c17_i32_127 = arith.constant 17 : i32
      %288 = tpu.dynamic_rotate %281 by %c17_i32_127 dim 1 : vector<8x256xf32>, i32 -> vector<8x256xf32>
      %cst_128 = arith.constant 0.000000e+00 : f32
      %289 = vector.shape_cast %25 : vector<1x256xi1> to vector<1x256xi1>
      %290 = vector.broadcast %289 : vector<1x256xi1> to vector<8x256xi1>
      %291 = vector.broadcast %cst_128 : f32 to vector<8x256xf32>
      %292 = arith.select %290, %288, %291 : vector<8x256xi1>, vector<8x256xf32>
      %c16_i32_129 = arith.constant 16 : i32
      %293 = tpu.dynamic_rotate %281 by %c16_i32_129 dim 1 : vector<8x256xf32>, i32 -> vector<8x256xf32>
      %cst_130 = arith.constant 0.000000e+00 : f32
      %294 = vector.shape_cast %22 : vector<1x256xi1> to vector<1x256xi1>
      %295 = vector.broadcast %294 : vector<1x256xi1> to vector<8x256xi1>
      %296 = vector.broadcast %cst_130 : f32 to vector<8x256xf32>
      %297 = arith.select %295, %293, %296 : vector<8x256xi1>, vector<8x256xf32>
      %c15_i32_131 = arith.constant 15 : i32
      %298 = tpu.dynamic_rotate %281 by %c15_i32_131 dim 1 : vector<8x256xf32>, i32 -> vector<8x256xf32>
      %cst_132 = arith.constant 0.000000e+00 : f32
      %299 = vector.shape_cast %26 : vector<1x256xi1> to vector<1x256xi1>
      %300 = vector.broadcast %299 : vector<1x256xi1> to vector<8x256xi1>
      %301 = vector.broadcast %cst_132 : f32 to vector<8x256xf32>
      %302 = arith.select %300, %298, %301 : vector<8x256xi1>, vector<8x256xf32>
      %c1_i32_133 = arith.constant 1 : i32
      %303 = tpu.dynamic_rotate %281 by %c1_i32_133 dim 1 : vector<8x256xf32>, i32 -> vector<8x256xf32>
      %cst_134 = arith.constant 0.000000e+00 : f32
      %304 = vector.shape_cast %18 : vector<1x256xi1> to vector<1x256xi1>
      %305 = vector.broadcast %304 : vector<1x256xi1> to vector<8x256xi1>
      %306 = vector.broadcast %cst_134 : f32 to vector<8x256xf32>
      %307 = arith.select %305, %303, %306 : vector<8x256xi1>, vector<8x256xf32>
      %c255_i32_135 = arith.constant 255 : i32
      %308 = tpu.dynamic_rotate %281 by %c255_i32_135 dim 1 : vector<8x256xf32>, i32 -> vector<8x256xf32>
      %cst_136 = arith.constant 0.000000e+00 : f32
      %309 = vector.shape_cast %20 : vector<1x256xi1> to vector<1x256xi1>
      %310 = vector.broadcast %309 : vector<1x256xi1> to vector<8x256xi1>
      %311 = vector.broadcast %cst_136 : f32 to vector<8x256xf32>
      %312 = arith.select %310, %308, %311 : vector<8x256xi1>, vector<8x256xf32>
      %c241_i32_137 = arith.constant 241 : i32
      %313 = tpu.dynamic_rotate %281 by %c241_i32_137 dim 1 : vector<8x256xf32>, i32 -> vector<8x256xf32>
      %cst_138 = arith.constant 0.000000e+00 : f32
      %314 = vector.shape_cast %27 : vector<1x256xi1> to vector<1x256xi1>
      %315 = vector.broadcast %314 : vector<1x256xi1> to vector<8x256xi1>
      %316 = vector.broadcast %cst_138 : f32 to vector<8x256xf32>
      %317 = arith.select %315, %313, %316 : vector<8x256xi1>, vector<8x256xf32>
      %c240_i32_139 = arith.constant 240 : i32
      %318 = tpu.dynamic_rotate %281 by %c240_i32_139 dim 1 : vector<8x256xf32>, i32 -> vector<8x256xf32>
      %cst_140 = arith.constant 0.000000e+00 : f32
      %319 = vector.shape_cast %24 : vector<1x256xi1> to vector<1x256xi1>
      %320 = vector.broadcast %319 : vector<1x256xi1> to vector<8x256xi1>
      %321 = vector.broadcast %cst_140 : f32 to vector<8x256xf32>
      %322 = arith.select %320, %318, %321 : vector<8x256xi1>, vector<8x256xf32>
      %c239_i32_141 = arith.constant 239 : i32
      %323 = tpu.dynamic_rotate %281 by %c239_i32_141 dim 1 : vector<8x256xf32>, i32 -> vector<8x256xf32>
      %cst_142 = arith.constant 0.000000e+00 : f32
      %324 = vector.shape_cast %28 : vector<1x256xi1> to vector<1x256xi1>
      %325 = vector.broadcast %324 : vector<1x256xi1> to vector<8x256xi1>
      %326 = vector.broadcast %cst_142 : f32 to vector<8x256xf32>
      %327 = arith.select %325, %323, %326 : vector<8x256xi1>, vector<8x256xf32>
      %328 = tpu.concatenate %292, %297, %302, %307, %281, %312, %317, %322, %327 in 0 : vector<8x256xf32>, vector<8x256xf32>, vector<8x256xf32>, vector<8x256xf32>, vector<8x256xf32>, vector<8x256xf32>, vector<8x256xf32>, vector<8x256xf32>, vector<8x256xf32> -> vector<72x256xf32>
      %cst_143 = arith.constant dense<0.000000e+00> : vector<8x256xf32>
      %329 = tpu.matmul %284, %328, %cst_143 {dimension_numbers = #tpu.dot_dimension_numbers<[1], [0], [0], [1], [0, 0, 1, 1], [], []>} : vector<8x72xf32>, vector<72x256xf32>, vector<8x256xf32> -> vector<8x256xf32>
      %330 = vector.broadcast %287 : vector<8x1xf32> to vector<8x256xf32>
      %331 = arith.addf %329, %330 : vector<8x256xf32>
      %332 = arith.addf %331, %arg15 : vector<8x256xf32>
      scf.yield %332 : vector<8x256xf32>
    }
    %c9_i32_28 = arith.constant 9 : i32
    %70 = arith.addf %69, %67 : vector<8x256xf32>
    %c0_29 = arith.constant 0 : index
    %c0_30 = arith.constant 0 : index
    %71 = vector.load %arg7[%c0_29, %c0_30] : memref<16x72xf32, #tpu.memory_space<vmem>>, vector<16x72xf32>
    %c0_31 = arith.constant 0 : index
    %c0_32 = arith.constant 0 : index
    %72 = vector.load %arg8[%c0_31, %c0_32] : memref<16x1xf32, #tpu.memory_space<vmem>>, vector<16x1xf32>
    %c10 = arith.constant 10 : index
    %73 = memref.load %arg2[%c10] : memref<12xf32, #tpu.memory_space<smem>>
    %c17_i32_33 = arith.constant 17 : i32
    %74 = tpu.dynamic_rotate %70 by %c17_i32_33 dim 1 : vector<8x256xf32>, i32 -> vector<8x256xf32>
    %cst_34 = arith.constant 0.000000e+00 : f32
    %75 = vector.shape_cast %25 : vector<1x256xi1> to vector<1x256xi1>
    %76 = vector.broadcast %75 : vector<1x256xi1> to vector<8x256xi1>
    %77 = vector.broadcast %cst_34 : f32 to vector<8x256xf32>
    %78 = arith.select %76, %74, %77 : vector<8x256xi1>, vector<8x256xf32>
    %c16_i32_35 = arith.constant 16 : i32
    %79 = tpu.dynamic_rotate %70 by %c16_i32_35 dim 1 : vector<8x256xf32>, i32 -> vector<8x256xf32>
    %cst_36 = arith.constant 0.000000e+00 : f32
    %80 = vector.shape_cast %22 : vector<1x256xi1> to vector<1x256xi1>
    %81 = vector.broadcast %80 : vector<1x256xi1> to vector<8x256xi1>
    %82 = vector.broadcast %cst_36 : f32 to vector<8x256xf32>
    %83 = arith.select %81, %79, %82 : vector<8x256xi1>, vector<8x256xf32>
    %c15_i32_37 = arith.constant 15 : i32
    %84 = tpu.dynamic_rotate %70 by %c15_i32_37 dim 1 : vector<8x256xf32>, i32 -> vector<8x256xf32>
    %cst_38 = arith.constant 0.000000e+00 : f32
    %85 = vector.shape_cast %26 : vector<1x256xi1> to vector<1x256xi1>
    %86 = vector.broadcast %85 : vector<1x256xi1> to vector<8x256xi1>
    %87 = vector.broadcast %cst_38 : f32 to vector<8x256xf32>
    %88 = arith.select %86, %84, %87 : vector<8x256xi1>, vector<8x256xf32>
    %c1_i32_39 = arith.constant 1 : i32
    %89 = tpu.dynamic_rotate %70 by %c1_i32_39 dim 1 : vector<8x256xf32>, i32 -> vector<8x256xf32>
    %cst_40 = arith.constant 0.000000e+00 : f32
    %90 = vector.shape_cast %18 : vector<1x256xi1> to vector<1x256xi1>
    %91 = vector.broadcast %90 : vector<1x256xi1> to vector<8x256xi1>
    %92 = vector.broadcast %cst_40 : f32 to vector<8x256xf32>
    %93 = arith.select %91, %89, %92 : vector<8x256xi1>, vector<8x256xf32>
    %c255_i32_41 = arith.constant 255 : i32
    %94 = tpu.dynamic_rotate %70 by %c255_i32_41 dim 1 : vector<8x256xf32>, i32 -> vector<8x256xf32>
    %cst_42 = arith.constant 0.000000e+00 : f32
    %95 = vector.shape_cast %20 : vector<1x256xi1> to vector<1x256xi1>
    %96 = vector.broadcast %95 : vector<1x256xi1> to vector<8x256xi1>
    %97 = vector.broadcast %cst_42 : f32 to vector<8x256xf32>
    %98 = arith.select %96, %94, %97 : vector<8x256xi1>, vector<8x256xf32>
    %c241_i32_43 = arith.constant 241 : i32
    %99 = tpu.dynamic_rotate %70 by %c241_i32_43 dim 1 : vector<8x256xf32>, i32 -> vector<8x256xf32>
    %cst_44 = arith.constant 0.000000e+00 : f32
    %100 = vector.shape_cast %27 : vector<1x256xi1> to vector<1x256xi1>
    %101 = vector.broadcast %100 : vector<1x256xi1> to vector<8x256xi1>
    %102 = vector.broadcast %cst_44 : f32 to vector<8x256xf32>
    %103 = arith.select %101, %99, %102 : vector<8x256xi1>, vector<8x256xf32>
    %c240_i32_45 = arith.constant 240 : i32
    %104 = tpu.dynamic_rotate %70 by %c240_i32_45 dim 1 : vector<8x256xf32>, i32 -> vector<8x256xf32>
    %cst_46 = arith.constant 0.000000e+00 : f32
    %105 = vector.shape_cast %24 : vector<1x256xi1> to vector<1x256xi1>
    %106 = vector.broadcast %105 : vector<1x256xi1> to vector<8x256xi1>
    %107 = vector.broadcast %cst_46 : f32 to vector<8x256xf32>
    %108 = arith.select %106, %104, %107 : vector<8x256xi1>, vector<8x256xf32>
    %c239_i32_47 = arith.constant 239 : i32
    %109 = tpu.dynamic_rotate %70 by %c239_i32_47 dim 1 : vector<8x256xf32>, i32 -> vector<8x256xf32>
    %cst_48 = arith.constant 0.000000e+00 : f32
    %110 = vector.shape_cast %28 : vector<1x256xi1> to vector<1x256xi1>
    %111 = vector.broadcast %110 : vector<1x256xi1> to vector<8x256xi1>
    %112 = vector.broadcast %cst_48 : f32 to vector<8x256xf32>
    %113 = arith.select %111, %109, %112 : vector<8x256xi1>, vector<8x256xf32>
    %114 = tpu.concatenate %78, %83, %88, %93, %70, %98, %103, %108, %113 in 0 : vector<8x256xf32>, vector<8x256xf32>, vector<8x256xf32>, vector<8x256xf32>, vector<8x256xf32>, vector<8x256xf32>, vector<8x256xf32>, vector<8x256xf32>, vector<8x256xf32> -> vector<72x256xf32>
    %cst_49 = arith.constant dense<0.000000e+00> : vector<16x256xf32>
    %115 = tpu.matmul %71, %114, %cst_49 {dimension_numbers = #tpu.dot_dimension_numbers<[1], [0], [0], [1], [0, 0, 1, 1], [], []>} : vector<16x72xf32>, vector<72x256xf32>, vector<16x256xf32> -> vector<16x256xf32>
    %116 = vector.broadcast %72 : vector<16x1xf32> to vector<16x256xf32>
    %117 = arith.addf %115, %116 : vector<16x256xf32>
    %cst_50 = arith.constant 0.000000e+00 : f32
    %118 = vector.broadcast %cst_50 : f32 to vector<16x256xf32>
    %119 = arith.cmpf oge, %117, %118 : vector<16x256xf32>
    %120 = vector.broadcast %73 : f32 to vector<16x256xf32>
    %121 = arith.mulf %120, %117 : vector<16x256xf32>
    %122 = arith.select %119, %117, %121 : vector<16x256xi1>, vector<16x256xf32>
    %c0_51 = arith.constant 0 : index
    %c0_52 = arith.constant 0 : index
    %123 = vector.load %arg9[%c0_51, %c0_52] : memref<32x144xf32, #tpu.memory_space<vmem>>, vector<32x144xf32>
    %c0_53 = arith.constant 0 : index
    %c0_54 = arith.constant 0 : index
    %124 = vector.load %arg10[%c0_53, %c0_54] : memref<32x1xf32, #tpu.memory_space<vmem>>, vector<32x1xf32>
    %c11 = arith.constant 11 : index
    %125 = memref.load %arg2[%c11] : memref<12xf32, #tpu.memory_space<smem>>
    %c17_i32_55 = arith.constant 17 : i32
    %126 = tpu.dynamic_rotate %122 by %c17_i32_55 dim 1 : vector<16x256xf32>, i32 -> vector<16x256xf32>
    %cst_56 = arith.constant 0.000000e+00 : f32
    %127 = vector.shape_cast %25 : vector<1x256xi1> to vector<1x256xi1>
    %128 = vector.broadcast %127 : vector<1x256xi1> to vector<16x256xi1>
    %129 = vector.broadcast %cst_56 : f32 to vector<16x256xf32>
    %130 = arith.select %128, %126, %129 : vector<16x256xi1>, vector<16x256xf32>
    %c16_i32_57 = arith.constant 16 : i32
    %131 = tpu.dynamic_rotate %122 by %c16_i32_57 dim 1 : vector<16x256xf32>, i32 -> vector<16x256xf32>
    %cst_58 = arith.constant 0.000000e+00 : f32
    %132 = vector.shape_cast %22 : vector<1x256xi1> to vector<1x256xi1>
    %133 = vector.broadcast %132 : vector<1x256xi1> to vector<16x256xi1>
    %134 = vector.broadcast %cst_58 : f32 to vector<16x256xf32>
    %135 = arith.select %133, %131, %134 : vector<16x256xi1>, vector<16x256xf32>
    %c15_i32_59 = arith.constant 15 : i32
    %136 = tpu.dynamic_rotate %122 by %c15_i32_59 dim 1 : vector<16x256xf32>, i32 -> vector<16x256xf32>
    %cst_60 = arith.constant 0.000000e+00 : f32
    %137 = vector.shape_cast %26 : vector<1x256xi1> to vector<1x256xi1>
    %138 = vector.broadcast %137 : vector<1x256xi1> to vector<16x256xi1>
    %139 = vector.broadcast %cst_60 : f32 to vector<16x256xf32>
    %140 = arith.select %138, %136, %139 : vector<16x256xi1>, vector<16x256xf32>
    %c1_i32_61 = arith.constant 1 : i32
    %141 = tpu.dynamic_rotate %122 by %c1_i32_61 dim 1 : vector<16x256xf32>, i32 -> vector<16x256xf32>
    %cst_62 = arith.constant 0.000000e+00 : f32
    %142 = vector.shape_cast %18 : vector<1x256xi1> to vector<1x256xi1>
    %143 = vector.broadcast %142 : vector<1x256xi1> to vector<16x256xi1>
    %144 = vector.broadcast %cst_62 : f32 to vector<16x256xf32>
    %145 = arith.select %143, %141, %144 : vector<16x256xi1>, vector<16x256xf32>
    %c255_i32_63 = arith.constant 255 : i32
    %146 = tpu.dynamic_rotate %122 by %c255_i32_63 dim 1 : vector<16x256xf32>, i32 -> vector<16x256xf32>
    %cst_64 = arith.constant 0.000000e+00 : f32
    %147 = vector.shape_cast %20 : vector<1x256xi1> to vector<1x256xi1>
    %148 = vector.broadcast %147 : vector<1x256xi1> to vector<16x256xi1>
    %149 = vector.broadcast %cst_64 : f32 to vector<16x256xf32>
    %150 = arith.select %148, %146, %149 : vector<16x256xi1>, vector<16x256xf32>
    %c241_i32_65 = arith.constant 241 : i32
    %151 = tpu.dynamic_rotate %122 by %c241_i32_65 dim 1 : vector<16x256xf32>, i32 -> vector<16x256xf32>
    %cst_66 = arith.constant 0.000000e+00 : f32
    %152 = vector.shape_cast %27 : vector<1x256xi1> to vector<1x256xi1>
    %153 = vector.broadcast %152 : vector<1x256xi1> to vector<16x256xi1>
    %154 = vector.broadcast %cst_66 : f32 to vector<16x256xf32>
    %155 = arith.select %153, %151, %154 : vector<16x256xi1>, vector<16x256xf32>
    %c240_i32_67 = arith.constant 240 : i32
    %156 = tpu.dynamic_rotate %122 by %c240_i32_67 dim 1 : vector<16x256xf32>, i32 -> vector<16x256xf32>
    %cst_68 = arith.constant 0.000000e+00 : f32
    %157 = vector.shape_cast %24 : vector<1x256xi1> to vector<1x256xi1>
    %158 = vector.broadcast %157 : vector<1x256xi1> to vector<16x256xi1>
    %159 = vector.broadcast %cst_68 : f32 to vector<16x256xf32>
    %160 = arith.select %158, %156, %159 : vector<16x256xi1>, vector<16x256xf32>
    %c239_i32_69 = arith.constant 239 : i32
    %161 = tpu.dynamic_rotate %122 by %c239_i32_69 dim 1 : vector<16x256xf32>, i32 -> vector<16x256xf32>
    %cst_70 = arith.constant 0.000000e+00 : f32
    %162 = vector.shape_cast %28 : vector<1x256xi1> to vector<1x256xi1>
    %163 = vector.broadcast %162 : vector<1x256xi1> to vector<16x256xi1>
    %164 = vector.broadcast %cst_70 : f32 to vector<16x256xf32>
    %165 = arith.select %163, %161, %164 : vector<16x256xi1>, vector<16x256xf32>
    %166 = tpu.concatenate %130, %135, %140, %145, %122, %150, %155, %160, %165 in 0 : vector<16x256xf32>, vector<16x256xf32>, vector<16x256xf32>, vector<16x256xf32>, vector<16x256xf32>, vector<16x256xf32>, vector<16x256xf32>, vector<16x256xf32>, vector<16x256xf32> -> vector<144x256xf32>
    %cst_71 = arith.constant dense<0.000000e+00> : vector<32x256xf32>
    %167 = tpu.matmul %123, %166, %cst_71 {dimension_numbers = #tpu.dot_dimension_numbers<[1], [0], [0], [1], [0, 0, 1, 1], [], []>} : vector<32x144xf32>, vector<144x256xf32>, vector<32x256xf32> -> vector<32x256xf32>
    %168 = vector.broadcast %124 : vector<32x1xf32> to vector<32x256xf32>
    %169 = arith.addf %167, %168 : vector<32x256xf32>
    %cst_72 = arith.constant 0.000000e+00 : f32
    %170 = vector.broadcast %cst_72 : f32 to vector<32x256xf32>
    %171 = arith.cmpf oge, %169, %170 : vector<32x256xf32>
    %172 = vector.broadcast %125 : f32 to vector<32x256xf32>
    %173 = arith.mulf %172, %169 : vector<32x256xf32>
    %174 = arith.select %171, %169, %173 : vector<32x256xi1>, vector<32x256xf32>
    %c0_73 = arith.constant 0 : index
    %c0_74 = arith.constant 0 : index
    %175 = vector.load %arg11[%c0_73, %c0_74] : memref<4x288xf32, #tpu.memory_space<vmem>>, vector<4x288xf32>
    %c0_75 = arith.constant 0 : index
    %c0_76 = arith.constant 0 : index
    %176 = vector.load %arg12[%c0_75, %c0_76] : memref<4x1xf32, #tpu.memory_space<vmem>>, vector<4x1xf32>
    %c17_i32_77 = arith.constant 17 : i32
    %177 = tpu.dynamic_rotate %174 by %c17_i32_77 dim 1 : vector<32x256xf32>, i32 -> vector<32x256xf32>
    %cst_78 = arith.constant 0.000000e+00 : f32
    %178 = vector.shape_cast %25 : vector<1x256xi1> to vector<1x256xi1>
    %179 = vector.broadcast %178 : vector<1x256xi1> to vector<32x256xi1>
    %180 = vector.broadcast %cst_78 : f32 to vector<32x256xf32>
    %181 = arith.select %179, %177, %180 : vector<32x256xi1>, vector<32x256xf32>
    %c16_i32_79 = arith.constant 16 : i32
    %182 = tpu.dynamic_rotate %174 by %c16_i32_79 dim 1 : vector<32x256xf32>, i32 -> vector<32x256xf32>
    %cst_80 = arith.constant 0.000000e+00 : f32
    %183 = vector.shape_cast %22 : vector<1x256xi1> to vector<1x256xi1>
    %184 = vector.broadcast %183 : vector<1x256xi1> to vector<32x256xi1>
    %185 = vector.broadcast %cst_80 : f32 to vector<32x256xf32>
    %186 = arith.select %184, %182, %185 : vector<32x256xi1>, vector<32x256xf32>
    %c15_i32_81 = arith.constant 15 : i32
    %187 = tpu.dynamic_rotate %174 by %c15_i32_81 dim 1 : vector<32x256xf32>, i32 -> vector<32x256xf32>
    %cst_82 = arith.constant 0.000000e+00 : f32
    %188 = vector.shape_cast %26 : vector<1x256xi1> to vector<1x256xi1>
    %189 = vector.broadcast %188 : vector<1x256xi1> to vector<32x256xi1>
    %190 = vector.broadcast %cst_82 : f32 to vector<32x256xf32>
    %191 = arith.select %189, %187, %190 : vector<32x256xi1>, vector<32x256xf32>
    %c1_i32_83 = arith.constant 1 : i32
    %192 = tpu.dynamic_rotate %174 by %c1_i32_83 dim 1 : vector<32x256xf32>, i32 -> vector<32x256xf32>
    %cst_84 = arith.constant 0.000000e+00 : f32
    %193 = vector.shape_cast %18 : vector<1x256xi1> to vector<1x256xi1>
    %194 = vector.broadcast %193 : vector<1x256xi1> to vector<32x256xi1>
    %195 = vector.broadcast %cst_84 : f32 to vector<32x256xf32>
    %196 = arith.select %194, %192, %195 : vector<32x256xi1>, vector<32x256xf32>
    %c255_i32_85 = arith.constant 255 : i32
    %197 = tpu.dynamic_rotate %174 by %c255_i32_85 dim 1 : vector<32x256xf32>, i32 -> vector<32x256xf32>
    %cst_86 = arith.constant 0.000000e+00 : f32
    %198 = vector.shape_cast %20 : vector<1x256xi1> to vector<1x256xi1>
    %199 = vector.broadcast %198 : vector<1x256xi1> to vector<32x256xi1>
    %200 = vector.broadcast %cst_86 : f32 to vector<32x256xf32>
    %201 = arith.select %199, %197, %200 : vector<32x256xi1>, vector<32x256xf32>
    %c241_i32_87 = arith.constant 241 : i32
    %202 = tpu.dynamic_rotate %174 by %c241_i32_87 dim 1 : vector<32x256xf32>, i32 -> vector<32x256xf32>
    %cst_88 = arith.constant 0.000000e+00 : f32
    %203 = vector.shape_cast %27 : vector<1x256xi1> to vector<1x256xi1>
    %204 = vector.broadcast %203 : vector<1x256xi1> to vector<32x256xi1>
    %205 = vector.broadcast %cst_88 : f32 to vector<32x256xf32>
    %206 = arith.select %204, %202, %205 : vector<32x256xi1>, vector<32x256xf32>
    %c240_i32_89 = arith.constant 240 : i32
    %207 = tpu.dynamic_rotate %174 by %c240_i32_89 dim 1 : vector<32x256xf32>, i32 -> vector<32x256xf32>
    %cst_90 = arith.constant 0.000000e+00 : f32
    %208 = vector.shape_cast %24 : vector<1x256xi1> to vector<1x256xi1>
    %209 = vector.broadcast %208 : vector<1x256xi1> to vector<32x256xi1>
    %210 = vector.broadcast %cst_90 : f32 to vector<32x256xf32>
    %211 = arith.select %209, %207, %210 : vector<32x256xi1>, vector<32x256xf32>
    %c239_i32_91 = arith.constant 239 : i32
    %212 = tpu.dynamic_rotate %174 by %c239_i32_91 dim 1 : vector<32x256xf32>, i32 -> vector<32x256xf32>
    %cst_92 = arith.constant 0.000000e+00 : f32
    %213 = vector.shape_cast %28 : vector<1x256xi1> to vector<1x256xi1>
    %214 = vector.broadcast %213 : vector<1x256xi1> to vector<32x256xi1>
    %215 = vector.broadcast %cst_92 : f32 to vector<32x256xf32>
    %216 = arith.select %214, %212, %215 : vector<32x256xi1>, vector<32x256xf32>
    %217 = tpu.concatenate %181, %186, %191, %196, %174, %201, %206, %211, %216 in 0 : vector<32x256xf32>, vector<32x256xf32>, vector<32x256xf32>, vector<32x256xf32>, vector<32x256xf32>, vector<32x256xf32>, vector<32x256xf32>, vector<32x256xf32>, vector<32x256xf32> -> vector<288x256xf32>
    %cst_93 = arith.constant dense<0.000000e+00> : vector<4x256xf32>
    %218 = tpu.matmul %175, %217, %cst_93 {dimension_numbers = #tpu.dot_dimension_numbers<[1], [0], [0], [1], [0, 0, 1, 1], [], []>} : vector<4x288xf32>, vector<288x256xf32>, vector<4x256xf32> -> vector<4x256xf32>
    %219 = vector.broadcast %176 : vector<4x1xf32> to vector<4x256xf32>
    %220 = arith.addf %218, %219 : vector<4x256xf32>
    %c0_94 = arith.constant 0 : index
    %c0_95 = arith.constant 0 : index
    %c0_96 = arith.constant 0 : index
    %221 = vector.load %arg13[%c0_94, %c0_95, %c0_96] : memref<1x4x256xf32, #tpu.memory_space<vmem>>, vector<1x4x256xf32>
    %222 = vector.shape_cast %221 : vector<1x4x256xf32> to vector<4x256xf32>
    %223 = vector.shape_cast %220 : vector<4x256xf32> to vector<1x4x256xf32>
    tpu.vector_store %arg13[%c0_94, %c0_95, %c0_96], %223 {strides = array<i32>} : memref<1x4x256xf32, #tpu.memory_space<vmem>>, vector<1x4x256xf32>,
    return
  }
  func.func @transform_0(%arg0: i32) -> (i32, i32, i32) {
    %c0_i32 = arith.constant 0 : i32
    %c0_i32_0 = arith.constant 0 : i32
    %c0_i32_1 = arith.constant 0 : i32
    return %arg0, %c0_i32, %c0_i32_0 : i32, i32, i32
  }
  func.func @transform_1(%arg0: i32) -> i32 {
    %c0_i32 = arith.constant 0 : i32
    %c0_i32_0 = arith.constant 0 : i32
    return %c0_i32 : i32
  }
  func.func @transform_2(%arg0: i32) -> (i32, i32) {
    %c0_i32 = arith.constant 0 : i32
    %c0_i32_0 = arith.constant 0 : i32
    %c0_i32_1 = arith.constant 0 : i32
    return %c0_i32, %c0_i32_0 : i32, i32
  }
  func.func @transform_3(%arg0: i32) -> (i32, i32) {
    %c0_i32 = arith.constant 0 : i32
    %c0_i32_0 = arith.constant 0 : i32
    %c0_i32_1 = arith.constant 0 : i32
    return %c0_i32, %c0_i32_0 : i32, i32
  }
  func.func @transform_4(%arg0: i32) -> (i32, i32, i32, i32) {
    %c0_i32 = arith.constant 0 : i32
    %c0_i32_0 = arith.constant 0 : i32
    %c0_i32_1 = arith.constant 0 : i32
    %c0_i32_2 = arith.constant 0 : i32
    %c0_i32_3 = arith.constant 0 : i32
    return %c0_i32, %c0_i32_0, %c0_i32_1, %c0_i32_2 : i32, i32, i32, i32
  }
  func.func @transform_5(%arg0: i32) -> (i32, i32, i32, i32) {
    %c0_i32 = arith.constant 0 : i32
    %c0_i32_0 = arith.constant 0 : i32
    %c0_i32_1 = arith.constant 0 : i32
    %c0_i32_2 = arith.constant 0 : i32
    %c0_i32_3 = arith.constant 0 : i32
    return %c0_i32, %c0_i32_0, %c0_i32_1, %c0_i32_2 : i32, i32, i32, i32
  }
  func.func @transform_6(%arg0: i32) -> (i32, i32) {
    %c0_i32 = arith.constant 0 : i32
    %c0_i32_0 = arith.constant 0 : i32
    %c0_i32_1 = arith.constant 0 : i32
    return %c0_i32, %c0_i32_0 : i32, i32
  }
  func.func @transform_7(%arg0: i32) -> (i32, i32) {
    %c0_i32 = arith.constant 0 : i32
    %c0_i32_0 = arith.constant 0 : i32
    %c0_i32_1 = arith.constant 0 : i32
    return %c0_i32, %c0_i32_0 : i32, i32
  }
  func.func @transform_8(%arg0: i32) -> (i32, i32) {
    %c0_i32 = arith.constant 0 : i32
    %c0_i32_0 = arith.constant 0 : i32
    %c0_i32_1 = arith.constant 0 : i32
    return %c0_i32, %c0_i32_0 : i32, i32
  }
  func.func @transform_9(%arg0: i32) -> (i32, i32) {
    %c0_i32 = arith.constant 0 : i32
    %c0_i32_0 = arith.constant 0 : i32
    %c0_i32_1 = arith.constant 0 : i32
    return %c0_i32, %c0_i32_0 : i32, i32
  }
  func.func @transform_10(%arg0: i32) -> (i32, i32) {
    %c0_i32 = arith.constant 0 : i32
    %c0_i32_0 = arith.constant 0 : i32
    %c0_i32_1 = arith.constant 0 : i32
    return %c0_i32, %c0_i32_0 : i32, i32
  }
  func.func @transform_11(%arg0: i32) -> (i32, i32) {
    %c0_i32 = arith.constant 0 : i32
    %c0_i32_0 = arith.constant 0 : i32
    %c0_i32_1 = arith.constant 0 : i32
    return %c0_i32, %c0_i32_0 : i32, i32
  }
  func.func @transform_12(%arg0: i32) -> (i32, i32, i32) {
    %c0_i32 = arith.constant 0 : i32
    %c0_i32_0 = arith.constant 0 : i32
    %c0_i32_1 = arith.constant 0 : i32
    return %arg0, %c0_i32, %c0_i32_0 : i32, i32, i32
  }
}

</mosaic_0001>

<llo_original>
// kernel: srgan_forward_pallas.1
$region0: #{srgan_forward_pallas.1}
  #allocation0 [shape = 'u32[]', space=smem, size = 0x4, offset = 0x4, fixed_abs, tag = 'smem constant byte address 0x4 - core index']
  #allocation1 [shape = 'u32[144,128]{1,0:T(1,128)}', space=vmem, size = 0x12000, scoped, tag = 'internal scratch']
  %s0 = inlined_call_operand.vmem [shape: f32[2,1,256], index: 0, kind: input, shape index: {}]
  %s1 = inlined_call_operand.vmem [shape: f32[12], index: 1, kind: input, shape index: {}]
  %s2 = inlined_call_operand.vmem [shape: f32[8,16], index: 2, kind: input, shape index: {}]
  %s3 = inlined_call_operand.vmem [shape: f32[8,1], index: 3, kind: input, shape index: {}]
  %s4 = inlined_call_operand.vmem [shape: f32[9,2,8,72], index: 4, kind: input, shape index: {}]
  %s5 = inlined_call_operand.vmem [shape: f32[9,2,8,1], index: 5, kind: input, shape index: {}]
  %s6 = inlined_call_operand.vmem [shape: f32[16,72], index: 6, kind: input, shape index: {}]
  %s7 = inlined_call_operand.vmem [shape: f32[16,1], index: 7, kind: input, shape index: {}]
  %s8 = inlined_call_operand.vmem [shape: f32[32,144], index: 8, kind: input, shape index: {}]
  %s9 = inlined_call_operand.vmem [shape: f32[32,1], index: 9, kind: input, shape index: {}]
  %s10 = inlined_call_operand.vmem [shape: f32[4,288], index: 10, kind: input, shape index: {}]
  %s11 = inlined_call_operand.vmem [shape: f32[4,1], index: 11, kind: input, shape index: {}]
  %s12 = inlined_call_operand.vmem [shape: f32[2,4,256], index: 12, kind: output, shape index: {}]
  %s13 = sld [smem:[#allocation0]]
  $region92: #{srgan_forward_pallas.1} parent=0
    _
  %s15 = ssub.s32 1, %s13
  %s16 = scalar_select 0, %s15, %s13
  $region1: #{srgan_forward_pallas.1} parent=0
    #allocation2 [shape = 'u8[512]{0}', space=smem, size = 0x200, scoped, tag = 'input window, operand 1, single buffered']
    #allocation3 [shape = 's32[2]{0}', space=sflag, size = 0x8, scoped, tag = 'scoped memory for srgan_forward_pallas.1']
    %17 = vsyncpa [#allocation3], 0
    loop: start=0, step=1, limit=4
    $region2: #{srgan_forward_pallas.1} parent=1 // loop_pre_header
      _
    $region3: #{srgan_forward_pallas.1} parent=1 // loop_header
      %s19 = sphi 0, %s23
      %p20 = scmp.ge.s32.totalorder %s19, 4
      %s29 = sphi 0, %s31
      %s32 = sphi 0, %s29
      %s33 = sphi 0, %s32
      %s49 = sphi 0, %s33
      %s53 = sphi 0, %s53
      %s55 = sphi 0, %s53
      %s56 = sphi 0, %s55
      %s70 = sphi 0, %s56
      %s74 = sphi 0, %s74
      %s76 = sphi 0, %s74
      %s77 = sphi 0, %s76
      %s91 = sphi 0, %s77
      %s95 = sphi 0, %s95
      %s97 = sphi 0, %s95
      %s98 = sphi 0, %s97
      %s112 = sphi 0, %s98
      %s116 = sphi 0, %s116
      %s118 = sphi 0, %s116
      %s119 = sphi 0, %s118
      %s133 = sphi 0, %s119
      %s137 = sphi 0, %s137
      %s139 = sphi 0, %s137
      %s140 = sphi 0, %s139
      %s154 = sphi 0, %s140
      %s158 = sphi 0, %s158
      %s160 = sphi 0, %s158
      %s161 = sphi 0, %s160
      %s175 = sphi 0, %s161
      %s179 = sphi 0, %s179
      %s181 = sphi 0, %s179
      %s182 = sphi 0, %s181
      %s196 = sphi 0, %s182
      %s200 = sphi 0, %s200
      %s202 = sphi 0, %s200
      %s203 = sphi 0, %s202
      %s217 = sphi 0, %s203
      %s221 = sphi 0, %s221
      %s223 = sphi 0, %s221
      %s224 = sphi 0, %s223
      %s238 = sphi 0, %s224
      %s242 = sphi 0, %s242
      %s244 = sphi 0, %s242
      %s245 = sphi 0, %s244
      %s259 = sphi 0, %s245
      %s263 = sphi 0, %s263
      %s265 = sphi 0, %s263
      %s266 = sphi 0, %s265
      %s280 = sphi 0, %s266
      %s286 = sphi 0, %s288
      %s289 = sphi 0, %s286
      %s290 = sphi 0, %s289
      %s306 = sphi 0, %s290
    $region4: #{srgan_forward_pallas.1} parent=1 // loop_header_branch
      %22 = sbr.rel (%p20) target = $region8
    $region5: #{srgan_forward_pallas.1} parent=1 // loop_body
      %s24 = ssub.s32 %s19, 1
      %s25 = ssub.s32 %s19, 2
      %s26 = sadd.s32 %s19, 1
      %s27 = ssub.s32 %s19, %s26
      %p28 = scmp.eq.s32.totalorder %s27, 0
      %s30 = sadd.s32 %s29, 1
      %s31 = scalar_select %p28, %s29, %s30
      %p34 = pneg %p28
      %p35 = scmp.eq.s32.totalorder %s19, 1
      %p36 = por %p34, %p35
      %p37 = scmp.ne.s32.totalorder %s29, %s32
      %p38 = scmp.eq.s32.totalorder %s19, 0
      %p39 = por %p37, %p38
      %p40 = scmp.ne.s32.totalorder %s29, %s32
      %p41 = scmp.eq.s32.totalorder %s24, 1
      %p42 = por %p40, %p41
      %p43 = scmp.ne.s32.totalorder %s32, %s33
      %p44 = scmp.eq.s32.totalorder %s24, 0
      %p45 = por %p43, %p44
      %p46 = scmp.ne.s32.totalorder %s32, %s33
      %p47 = scmp.eq.s32.totalorder %s25, 1
      %p48 = por %p46, %p47
      %p50 = scmp.ne.s32.totalorder %s33, %s49
      %p51 = scmp.eq.s32.totalorder %s25, 0
      %p52 = por %p50, %p51
      %s54 = sadd.s32 %s53, 1
      %p57 = scmp.eq.s32.totalorder %s19, 1
      %p58 = scmp.ne.s32.totalorder %s53, %s55
      %p59 = scmp.eq.s32.totalorder %s19, 0
      %p60 = por %p58, %p59
      %p61 = scmp.ne.s32.totalorder %s53, %s55
      %p62 = scmp.eq.s32.totalorder %s24, 1
      %p63 = por %p61, %p62
      %p64 = scmp.ne.s32.totalorder %s55, %s56
      %p65 = scmp.eq.s32.totalorder %s24, 0
      %p66 = por %p64, %p65
      %p67 = scmp.ne.s32.totalorder %s55, %s56
      %p68 = scmp.eq.s32.totalorder %s25, 1
      %p69 = por %p67, %p68
      %p71 = scmp.ne.s32.totalorder %s56, %s70
      %p72 = scmp.eq.s32.totalorder %s25, 0
      %p73 = por %p71, %p72
      %s75 = sadd.s32 %s74, 1
      %p78 = scmp.eq.s32.totalorder %s19, 1
      %p79 = scmp.ne.s32.totalorder %s74, %s76
      %p80 = scmp.eq.s32.totalorder %s19, 0
      %p81 = por %p79, %p80
      %p82 = scmp.ne.s32.totalorder %s74, %s76
      %p83 = scmp.eq.s32.totalorder %s24, 1
      %p84 = por %p82, %p83
      %p85 = scmp.ne.s32.totalorder %s76, %s77
      %p86 = scmp.eq.s32.totalorder %s24, 0
      %p87 = por %p85, %p86
      %p88 = scmp.ne.s32.totalorder %s76, %s77
      %p89 = scmp.eq.s32.totalorder %s25, 1
      %p90 = por %p88, %p89
      %p92 = scmp.ne.s32.totalorder %s77, %s91
      %p93 = scmp.eq.s32.totalorder %s25, 0
      %p94 = por %p92, %p93
      %s96 = sadd.s32 %s95, 1
      %p99 = scmp.eq.s32.totalorder %s19, 1
      %p100 = scmp.ne.s32.totalorder %s95, %s97
      %p101 = scmp.eq.s32.totalorder %s19, 0
      %p102 = por %p100, %p101
      %p103 = scmp.ne.s32.totalorder %s95, %s97
      %p104 = scmp.eq.s32.totalorder %s24, 1
      %p105 = por %p103, %p104
      %p106 = scmp.ne.s32.totalorder %s97, %s98
      %p107 = scmp.eq.s32.totalorder %s24, 0
      %p108 = por %p106, %p107
      %p109 = scmp.ne.s32.totalorder %s97, %s98
      %p110 = scmp.eq.s32.totalorder %s25, 1
      %p111 = por %p109, %p110
      %p113 = scmp.ne.s32.totalorder %s98, %s112
      %p114 = scmp.eq.s32.totalorder %s25, 0
      %p115 = por %p113, %p114
      %s117 = sadd.s32 %s116, 1
      %p120 = scmp.eq.s32.totalorder %s19, 1
      %p121 = scmp.ne.s32.totalorder %s116, %s118
      %p122 = scmp.eq.s32.totalorder %s19, 0
      %p123 = por %p121, %p122
      %p124 = scmp.ne.s32.totalorder %s116, %s118
      %p125 = scmp.eq.s32.totalorder %s24, 1
      %p126 = por %p124, %p125
      %p127 = scmp.ne.s32.totalorder %s118, %s119
      %p128 = scmp.eq.s32.totalorder %s24, 0
      %p129 = por %p127, %p128
      %p130 = scmp.ne.s32.totalorder %s118, %s119
      %p131 = scmp.eq.s32.totalorder %s25, 1
      %p132 = por %p130, %p131
      %p134 = scmp.ne.s32.totalorder %s119, %s133
      %p135 = scmp.eq.s32.totalorder %s25, 0
      %p136 = por %p134, %p135
      %s138 = sadd.s32 %s137, 1
      %p141 = scmp.eq.s32.totalorder %s19, 1
      %p142 = scmp.ne.s32.totalorder %s137, %s139
      %p143 = scmp.eq.s32.totalorder %s19, 0
      %p144 = por %p142, %p143
      %p145 = scmp.ne.s32.totalorder %s137, %s139
      %p146 = scmp.eq.s32.totalorder %s24, 1
      %p147 = por %p145, %p146
      %p148 = scmp.ne.s32.totalorder %s139, %s140
      %p149 = scmp.eq.s32.totalorder %s24, 0
      %p150 = por %p148, %p149
      %p151 = scmp.ne.s32.totalorder %s139, %s140
      %p152 = scmp.eq.s32.totalorder %s25, 1
      %p153 = por %p151, %p152
      %p155 = scmp.ne.s32.totalorder %s140, %s154
      %p156 = scmp.eq.s32.totalorder %s25, 0
      %p157 = por %p155, %p156
      %s159 = sadd.s32 %s158, 1
      %p162 = scmp.eq.s32.totalorder %s19, 1
      %p163 = scmp.ne.s32.totalorder %s158, %s160
      %p164 = scmp.eq.s32.totalorder %s19, 0
      %p165 = por %p163, %p164
      %p166 = scmp.ne.s32.totalorder %s158, %s160
      %p167 = scmp.eq.s32.totalorder %s24, 1
      %p168 = por %p166, %p167
      %p169 = scmp.ne.s32.totalorder %s160, %s161
      %p170 = scmp.eq.s32.totalorder %s24, 0
      %p171 = por %p169, %p170
      %p172 = scmp.ne.s32.totalorder %s160, %s161
      %p173 = scmp.eq.s32.totalorder %s25, 1
      %p174 = por %p172, %p173
      %p176 = scmp.ne.s32.totalorder %s161, %s175
      %p177 = scmp.eq.s32.totalorder %s25, 0
      %p178 = por %p176, %p177
      %s180 = sadd.s32 %s179, 1
      %p183 = scmp.eq.s32.totalorder %s19, 1
      %p184 = scmp.ne.s32.totalorder %s179, %s181
      %p185 = scmp.eq.s32.totalorder %s19, 0
      %p186 = por %p184, %p185
      %p187 = scmp.ne.s32.totalorder %s179, %s181
      %p188 = scmp.eq.s32.totalorder %s24, 1
      %p189 = por %p187, %p188
      %p190 = scmp.ne.s32.totalorder %s181, %s182
      %p191 = scmp.eq.s32.totalorder %s24, 0
      %p192 = por %p190, %p191
      %p193 = scmp.ne.s32.totalorder %s181, %s182
      %p194 = scmp.eq.s32.totalorder %s25, 1
      %p195 = por %p193, %p194
      %p197 = scmp.ne.s32.totalorder %s182, %s196
      %p198 = scmp.eq.s32.totalorder %s25, 0
      %p199 = por %p197, %p198
      %s201 = sadd.s32 %s200, 1
      %p204 = scmp.eq.s32.totalorder %s19, 1
      %p205 = scmp.ne.s32.totalorder %s200, %s202
      %p206 = scmp.eq.s32.totalorder %s19, 0
      %p207 = por %p205, %p206
      %p208 = scmp.ne.s32.totalorder %s200, %s202
      %p209 = scmp.eq.s32.totalorder %s24, 1
      %p210 = por %p208, %p209
      %p211 = scmp.ne.s32.totalorder %s202, %s203
      %p212 = scmp.eq.s32.totalorder %s24, 0
      %p213 = por %p211, %p212
      %p214 = scmp.ne.s32.totalorder %s202, %s203
      %p215 = scmp.eq.s32.totalorder %s25, 1
      %p216 = por %p214, %p215
      %p218 = scmp.ne.s32.totalorder %s203, %s217
      %p219 = scmp.eq.s32.totalorder %s25, 0
      %p220 = por %p218, %p219
      %s222 = sadd.s32 %s221, 1
      %p225 = scmp.eq.s32.totalorder %s19, 1
      %p226 = scmp.ne.s32.totalorder %s221, %s223
      %p227 = scmp.eq.s32.totalorder %s19, 0
      %p228 = por %p226, %p227
      %p229 = scmp.ne.s32.totalorder %s221, %s223
      %p230 = scmp.eq.s32.totalorder %s24, 1
      %p231 = por %p229, %p230
      %p232 = scmp.ne.s32.totalorder %s223, %s224
      %p233 = scmp.eq.s32.totalorder %s24, 0
      %p234 = por %p232, %p233
      %p235 = scmp.ne.s32.totalorder %s223, %s224
      %p236 = scmp.eq.s32.totalorder %s25, 1
      %p237 = por %p235, %p236
      %p239 = scmp.ne.s32.totalorder %s224, %s238
      %p240 = scmp.eq.s32.totalorder %s25, 0
      %p241 = por %p239, %p240
      %s243 = sadd.s32 %s242, 1
      %p246 = scmp.eq.s32.totalorder %s19, 1
      %p247 = scmp.ne.s32.totalorder %s242, %s244
      %p248 = scmp.eq.s32.totalorder %s19, 0
      %p249 = por %p247, %p248
      %p250 = scmp.ne.s32.totalorder %s242, %s244
      %p251 = scmp.eq.s32.totalorder %s24, 1
      %p252 = por %p250, %p251
      %p253 = scmp.ne.s32.totalorder %s244, %s245
      %p254 = scmp.eq.s32.totalorder %s24, 0
      %p255 = por %p253, %p254
      %p256 = scmp.ne.s32.totalorder %s244, %s245
      %p257 = scmp.eq.s32.totalorder %s25, 1
      %p258 = por %p256, %p257
      %p260 = scmp.ne.s32.totalorder %s245, %s259
      %p261 = scmp.eq.s32.totalorder %s25, 0
      %p262 = por %p260, %p261
      %s264 = sadd.s32 %s263, 1
      %p267 = scmp.eq.s32.totalorder %s19, 1
      %p268 = scmp.ne.s32.totalorder %s263, %s265
      %p269 = scmp.eq.s32.totalorder %s19, 0
      %p270 = por %p268, %p269
      %p271 = scmp.ne.s32.totalorder %s263, %s265
      %p272 = scmp.eq.s32.totalorder %s24, 1
      %p273 = por %p271, %p272
      %p274 = scmp.ne.s32.totalorder %s265, %s266
      %p275 = scmp.eq.s32.totalorder %s24, 0
      %p276 = por %p274, %p275
      %p277 = scmp.ne.s32.totalorder %s265, %s266
      %p278 = scmp.eq.s32.totalorder %s25, 1
      %p279 = por %p277, %p278
      %p281 = scmp.ne.s32.totalorder %s266, %s280
      %p282 = scmp.eq.s32.totalorder %s25, 0
      %p283 = por %p281, %p282
      %s284 = ssub.s32 %s19, %s26
      %p285 = scmp.eq.s32.totalorder %s284, 0
      %s287 = sadd.s32 %s286, 1
      %s288 = scalar_select %p285, %s286, %s287
      %p291 = pneg %p285
      %p292 = scmp.eq.s32.totalorder %s19, 1
      %p293 = por %p291, %p292
      %p294 = scmp.ne.s32.totalorder %s286, %s289
      %p295 = scmp.eq.s32.totalorder %s19, 0
      %p296 = por %p294, %p295
      %p297 = scmp.ne.s32.totalorder %s286, %s289
      %p298 = scmp.eq.s32.totalorder %s24, 1
      %p299 = por %p297, %p298
      %p300 = scmp.ne.s32.totalorder %s289, %s290
      %p301 = scmp.eq.s32.totalorder %s24, 0
      %p302 = por %p300, %p301
      %p303 = scmp.ne.s32.totalorder %s289, %s290
      %p304 = scmp.eq.s32.totalorder %s25, 1
      %p305 = por %p303, %p304
      %p307 = scmp.ne.s32.totalorder %s290, %s306
      %p308 = scmp.eq.s32.totalorder %s25, 0
      %p309 = por %p307, %p308
      %p310 = scmp.le.s32.totalorder 1, %s19
      %p311 = scmp.lt.s32.totalorder %s19, 3
      %p312 = pnand %p310, %p311
      %p313 = pneg %p312
      // Predicated region
      $region9: #{srgan_forward_pallas.1} parent=5 // pred_check
        _
      $region10: #{srgan_forward_pallas.1} parent=5 // pred_check_branch
        %315 = sbr.rel (%p312) target = $region12
      $region11: #{srgan_forward_pallas.1} parent=5 // pred_region
        %s316 = ssub.s32 %s19, 1
        // Predicated region
        $region13: #{srgan_forward_pallas.1} parent=11 // pred_check
          %p317 = pneg %p66
        $region14: #{srgan_forward_pallas.1} parent=11 // pred_check_branch
          %319 = sbr.rel (%p317) target = $region16
        $region15: #{srgan_forward_pallas.1} parent=11 // pred_region
          %s321 = ssub.s32 16, 16
          %322 = vsyncadd [#allocation3], %s321
          %s324 = sshll.u32 %s1, 4
          %s325 = int_to_ptr.vmem [resolvable:$true] %s324
          %327 = dma.vmem_to_smem %s325, 16, [#allocation2], [#allocation3]
        $region16: #{srgan_forward_pallas.1} parent=11 // pred_fallthru
          _
        // Predicated region
        $region17: #{srgan_forward_pallas.1} parent=11 // pred_check
          %p328 = pneg %p87
        $region18: #{srgan_forward_pallas.1} parent=11 // pred_check_branch
          %330 = sbr.rel (%p328) target = $region20
        $region19: #{srgan_forward_pallas.1} parent=11 // pred_region
          _
        $region20: #{srgan_forward_pallas.1} parent=11 // pred_fallthru
          _
        // Predicated region
        $region21: #{srgan_forward_pallas.1} parent=11 // pred_check
          %p331 = pneg %p108
        $region22: #{srgan_forward_pallas.1} parent=11 // pred_check_branch
          %333 = sbr.rel (%p331) target = $region24
        $region23: #{srgan_forward_pallas.1} parent=11 // pred_region
          _
        $region24: #{srgan_forward_pallas.1} parent=11 // pred_fallthru
          _
        // Predicated region
        $region25: #{srgan_forward_pallas.1} parent=11 // pred_check
          %p334 = pneg %p129
        $region26: #{srgan_forward_pallas.1} parent=11 // pred_check_branch
          %336 = sbr.rel (%p334) target = $region28
        $region27: #{srgan_forward_pallas.1} parent=11 // pred_region
          _
        $region28: #{srgan_forward_pallas.1} parent=11 // pred_fallthru
          _
        // Predicated region
        $region29: #{srgan_forward_pallas.1} parent=11 // pred_check
          %p337 = pneg %p150
        $region30: #{srgan_forward_pallas.1} parent=11 // pred_check_branch
          %339 = sbr.rel (%p337) target = $region32
        $region31: #{srgan_forward_pallas.1} parent=11 // pred_region
          _
        $region32: #{srgan_forward_pallas.1} parent=11 // pred_fallthru
          _
        // Predicated region
        $region33: #{srgan_forward_pallas.1} parent=11 // pred_check
          %p340 = pneg %p171
        $region34: #{srgan_forward_pallas.1} parent=11 // pred_check_branch
          %342 = sbr.rel (%p340) target = $region36
        $region35: #{srgan_forward_pallas.1} parent=11 // pred_region
          _
        $region36: #{srgan_forward_pallas.1} parent=11 // pred_fallthru
          _
        // Predicated region
        $region37: #{srgan_forward_pallas.1} parent=11 // pred_check
          %p343 = pneg %p192
        $region38: #{srgan_forward_pallas.1} parent=11 // pred_check_branch
          %345 = sbr.rel (%p343) target = $region40
        $region39: #{srgan_forward_pallas.1} parent=11 // pred_region
          _
        $region40: #{srgan_forward_pallas.1} parent=11 // pred_fallthru
          _
        // Predicated region
        $region41: #{srgan_forward_pallas.1} parent=11 // pred_check
          %p346 = pneg %p213
        $region42: #{srgan_forward_pallas.1} parent=11 // pred_check_branch
          %348 = sbr.rel (%p346) target = $region44
        $region43: #{srgan_forward_pallas.1} parent=11 // pred_region
          _
        $region44: #{srgan_forward_pallas.1} parent=11 // pred_fallthru
          _
        // Predicated region
        $region45: #{srgan_forward_pallas.1} parent=11 // pred_check
          %p349 = pneg %p234
        $region46: #{srgan_forward_pallas.1} parent=11 // pred_check_branch
          %351 = sbr.rel (%p349) target = $region48
        $region47: #{srgan_forward_pallas.1} parent=11 // pred_region
          _
        $region48: #{srgan_forward_pallas.1} parent=11 // pred_fallthru
          _
        // Predicated region
        $region49: #{srgan_forward_pallas.1} parent=11 // pred_check
          %p352 = pneg %p255
        $region50: #{srgan_forward_pallas.1} parent=11 // pred_check_branch
          %354 = sbr.rel (%p352) target = $region52
        $region51: #{srgan_forward_pallas.1} parent=11 // pred_region
          _
        $region52: #{srgan_forward_pallas.1} parent=11 // pred_fallthru
          _
        // Predicated region
        $region53: #{srgan_forward_pallas.1} parent=11 // pred_check
          %p355 = pneg %p276
        $region54: #{srgan_forward_pallas.1} parent=11 // pred_check_branch
          %357 = sbr.rel (%p355) target = $region56
        $region55: #{srgan_forward_pallas.1} parent=11 // pred_region
          _
        $region56: #{srgan_forward_pallas.1} parent=11 // pred_fallthru
          _
      $region12: #{srgan_forward_pallas.1} parent=5 // pred_fallthru
        _
      %p358 = scmp.lt.s32.totalorder %s19, 2
      // Predicated region
      $region57: #{srgan_forward_pallas.1} parent=5 // pred_check
        %p359 = pneg %p358
      $region58: #{srgan_forward_pallas.1} parent=5 // pred_check_branch
        %361 = sbr.rel (%p359) target = $region60
      $region59: #{srgan_forward_pallas.1} parent=5 // pred_region
        // Predicated region
        $region61: #{srgan_forward_pallas.1} parent=59 // pred_check
          %p362 = pneg %p39
        $region62: #{srgan_forward_pallas.1} parent=59 // pred_check_branch
          %364 = sbr.rel (%p362) target = $region64
        $region63: #{srgan_forward_pallas.1} parent=59 // pred_region
          %p365 = scmp.lt.s32.totalorder %s19, 1
          %s366 = scalar_select %p365, %s19, 1
          %s367 = smul.addr %s366, 2
          %s368 = scalar_lea.vmem %s0, %s367
        $region64: #{srgan_forward_pallas.1} parent=59 // pred_fallthru
          _
      $region60: #{srgan_forward_pallas.1} parent=5 // pred_fallthru
        _
      %p369 = scmp.le.s32.totalorder 1, %s19
      %p370 = scmp.lt.s32.totalorder %s19, 3
      %p371 = pnand %p369, %p370
      %p372 = pneg %p371
      // Predicated region
      $region65: #{srgan_forward_pallas.1} parent=5 // pred_check
        _
      $region66: #{srgan_forward_pallas.1} parent=5 // pred_check_branch
        %374 = sbr.rel (%p371) target = $region68
      $region67: #{srgan_forward_pallas.1} parent=5 // pred_region
        %s375 = ssub.s32 %s19, 1
        // Predicated region
        $region69: #{srgan_forward_pallas.1} parent=67 // pred_check
          %p376 = pneg %p66
        $region70: #{srgan_forward_pallas.1} parent=67 // pred_check_branch
          %378 = sbr.rel (%p376) target = $region72
        $region71: #{srgan_forward_pallas.1} parent=67 // pred_region
          %379 = dma.done [#allocation3], 16
        $region72: #{srgan_forward_pallas.1} parent=67 // pred_fallthru
          _
        %380 = sfence
        %p381 = scmp.lt.s32.totalorder %s24, 1
        %s382 = scalar_select %p381, %s24, 1
        %s383 = smul.addr %s382, 2
        %s384 = scalar_lea.vmem %s0, %s383
        %p385 = pneg %p45
        %p386 = pneg %p42
        %p387 = pneg %p66
        %p388 = pneg %p63
        %p389 = pneg %p87
        %p390 = pneg %p84
        %p391 = pneg %p108
        %p392 = pneg %p105
        %p393 = pneg %p129
        %p394 = pneg %p126
        %p395 = pneg %p150
        %p396 = pneg %p147
        %p397 = pneg %p171
        %p398 = pneg %p168
        %p399 = pneg %p192
        %p400 = pneg %p189
        %p401 = pneg %p213
        %p402 = pneg %p210
        %p403 = pneg %p234
        %p404 = pneg %p231
        %p405 = pneg %p255
        %p406 = pneg %p252
        %p407 = pneg %p276
        %p408 = pneg %p273
        %p409 = pneg %p302
        %p410 = pneg %p299
        %p411 = scmp.lt.s32.totalorder %s24, 1
        %s412 = scalar_select %p411, %s24, 1
        %s413 = smul.addr %s412, 2
        %s414 = smul.addr %s413, 4
        %s415 = scalar_lea.vmem %s12, %s414
        %p416 = scmp.lt.s32.totalorder %s24, 1
        %s417 = scalar_select %p416, %s24, 1
        %s418 = smul.addr %s417, 2
        %s419 = scalar_lea.vmem %s0, %s418
        %p420 = scmp.lt.s32.totalorder %s24, 1
        %s421 = scalar_select %p420, %s24, 1
        %s422 = smul.addr %s421, 2
        %s423 = smul.addr %s422, 4
        %s424 = scalar_lea.vmem %s12, %s423
        %v425 = vlaneseq
        %v426 = vand.u32 %v425, 127
        %v427 = vadd.s32 %v426, 128
        %vm428 = vcmp.lt.s32.totalorder %v426, 0
        %v429 = vsub.s32 0, %v426
        %v430 = vsel %vm428, %v429, %v426
        %v431 = vshrl.u32 %v430, 4
        %v432 = vand.u32 %v430, 15
        %v433 = vsub.s32 0, %v432
        %v434 = vsel %vm428, %v433, %v432
        %vm435 = vcmp.lt.s32.totalorder %v427, 0
        %v436 = vsub.s32 0, %v427
        %v437 = vsel %vm435, %v436, %v427
        %v438 = vshrl.u32 %v437, 4
        %v439 = vand.u32 %v437, 15
        %v440 = vsub.s32 0, %v439
        %v441 = vsel %vm435, %v440, %v439
        %vm442 = vcmp.ne.s32.totalorder %v434, 0
        %vm443 = vcmp.ne.s32.totalorder %v441, 0
        %vm444 = vcmp.lt.s32.totalorder %v434, 0
        %vm445 = vcmp.lt.s32.totalorder %v441, 0
        %vm446 = vmand %vm444, %vm442
        %vm447 = vmand %vm445, %vm443
        %v448 = vadd.s32 %v434, 16
        %v449 = vadd.s32 %v441, 16
        %v450 = vsel %vm446, %v448, %v434
        %v451 = vsel %vm447, %v449, %v441
        %vm452 = vcmp.gt.s32.totalorder %v450, 0
        %vm453 = vcmp.gt.s32.totalorder %v451, 0
        %vm454 = vcmp.lt.s32.totalorder %v450, 15
        %vm455 = vcmp.lt.s32.totalorder %v451, 15
        %vm456 = vcmp.ge.s32.totalorder %v426, 16
        %vm457 = vcmp.ge.s32.totalorder %v427, 16
        %vm458 = vcmp.lt.s32.totalorder %v426, 240
        %vm459 = vcmp.lt.s32.totalorder %v427, 240
        %vm460 = vmand %vm456, %vm452
        %vm461 = vmand %vm457, %vm453
        %vm462 = vmand %vm456, %vm454
        %vm463 = vmand %vm457, %vm455
        %vm464 = vmand %vm458, %vm452
        %vm465 = vmand %vm459, %vm453
        %vm466 = vmand %vm458, %vm454
        %vm467 = vmand %vm459, %vm455
        %v468 = vld [vmem:[%s419] sm:$0x3]
        %v469 = vld [vmem:[%s2] sm:$0xff]
        %v470 = vld [vmem:[%s3] sm:$0xff]
        %s471 = sld [smem:[#allocation2]]
        %v473 = vlaneseq
        %v474 = vshrl.u32 %v473, 7
        %v475 = vsub.s32 0, %v474
        %v476 = vrot.slane %v468, %v475
        %v477 = vlaneseq
        %v478 = vshrl.u32 %v477, 7
        %v479 = vsub.s32 1, %v478
        %v480 = vrot.slane %v468, %v479
        %483 = vrot.lane.b32.xlu0 %v476, 17
        %v484 = vpop.permute.xlu0 %483
        %485 = vrot.lane.b32.xlu0 %v480, 17
        %v486 = vpop.permute.xlu0 %485
        %vm487 = vcmp.lt.s32.totalorder %v426, 17
        %v488 = vsel %vm487, %v484, %v486
        %v489 = vsel %vm487, %v486, %v484
        %v490 = vsel %vm460, %v489, 0.0
        %v491 = vsel %vm461, %v488, 0.0
        %492 = vrot.lane.b32.xlu0 %v476, 16
        %v493 = vpop.permute.xlu0 %492
        %494 = vrot.lane.b32.xlu0 %v480, 16
        %v495 = vpop.permute.xlu0 %494
        %vm496 = vcmp.lt.s32.totalorder %v426, 16
        %v497 = vsel %vm496, %v493, %v495
        %v498 = vsel %vm496, %v495, %v493
        %v499 = vsel %vm456, %v498, 0.0
        %v500 = vsel %vm457, %v497, 0.0
        %501 = vrot.lane.b32.xlu0 %v476, 15
        %v502 = vpop.permute.xlu0 %501
        %503 = vrot.lane.b32.xlu0 %v480, 15
        %v504 = vpop.permute.xlu0 %503
        %vm505 = vcmp.lt.s32.totalorder %v426, 15
        %v506 = vsel %vm505, %v502, %v504
        %v507 = vsel %vm505, %v504, %v502
        %v508 = vsel %vm462, %v507, 0.0
        %v509 = vsel %vm463, %v506, 0.0
        %510 = vrot.lane.b32.xlu0 %v476, 1
        %v511 = vpop.permute.xlu0 %510
        %512 = vrot.lane.b32.xlu0 %v480, 1
        %v513 = vpop.permute.xlu0 %512
        %vm514 = vcmp.lt.s32.totalorder %v426, 1
        %v515 = vsel %vm514, %v511, %v513
        %v516 = vsel %vm514, %v513, %v511
        %v517 = vsel %vm452, %v516, 0.0
        %v518 = vsel %vm453, %v515, 0.0
        %519 = vrot.lane.b32.xlu0 %v476, 127
        %v520 = vpop.permute.xlu0 %519
        %521 = vrot.lane.b32.xlu0 %v480, 127
        %v522 = vpop.permute.xlu0 %521
        %vm523 = vcmp.lt.s32.totalorder %v426, 127
        %v524 = vsel %vm523, %v520, %v522
        %v525 = vsel %vm523, %v522, %v520
        %v526 = vsel %vm454, %v524, 0.0
        %v527 = vsel %vm455, %v525, 0.0
        %528 = vrot.lane.b32.xlu0 %v476, 113
        %v529 = vpop.permute.xlu0 %528
        %530 = vrot.lane.b32.xlu0 %v480, 113
        %v531 = vpop.permute.xlu0 %530
        %vm532 = vcmp.lt.s32.totalorder %v426, 113
        %v533 = vsel %vm532, %v529, %v531
        %v534 = vsel %vm532, %v531, %v529
        %v535 = vsel %vm464, %v533, 0.0
        %v536 = vsel %vm465, %v534, 0.0
        %537 = vrot.lane.b32.xlu0 %v476, 112
        %v538 = vpop.permute.xlu0 %537
        %539 = vrot.lane.b32.xlu0 %v480, 112
        %v540 = vpop.permute.xlu0 %539
        %vm541 = vcmp.lt.s32.totalorder %v426, 112
        %v542 = vsel %vm541, %v538, %v540
        %v543 = vsel %vm541, %v540, %v538
        %v544 = vsel %vm458, %v542, 0.0
        %v545 = vsel %vm459, %v543, 0.0
        %546 = vrot.lane.b32.xlu0 %v476, 111
        %v547 = vpop.permute.xlu0 %546
        %548 = vrot.lane.b32.xlu0 %v480, 111
        %v549 = vpop.permute.xlu0 %548
        %vm550 = vcmp.lt.s32.totalorder %v426, 111
        %v551 = vsel %vm550, %v547, %v549
        %v552 = vsel %vm550, %v549, %v547
        %v553 = vsel %vm466, %v551, 0.0
        %v554 = vsel %vm467, %v552, 0.0
        %v557 = vrot.slane %v499, 7
        %v558 = vrot.slane %v500, 7
        %v563 = vrot.slane %v508, 6
        %v564 = vrot.slane %v509, 6
        %v569 = vrot.slane %v517, 5
        %v570 = vrot.slane %v518, 5
        %v575 = vrot.slane %v526, 3
        %v576 = vrot.slane %v527, 3
        %v581 = vrot.slane %v535, 2
        %v582 = vrot.slane %v536, 2
        %v587 = vrot.slane %v544, 1
        %v588 = vrot.slane %v545, 1
        %vm591 = vcmask 1040384
        %v592 = vsel %vm591, %v490, %v557
        %v593 = vsel %vm591, %v491, %v558
        %vm594 = vcmask 1041408
        %v595 = vsel %vm594, %v592, %v563
        %v596 = vsel %vm594, %v593, %v564
        %vm597 = vcmask 1042432
        %v598 = vsel %vm597, %v595, %v569
        %v599 = vsel %vm597, %v596, %v570
        %vm600 = vcmask 1043456
        %v601 = vsel %vm600, %v598, %v476
        %v602 = vsel %vm600, %v599, %v480
        %vm603 = vcmask 1044480
        %v604 = vsel %vm603, %v601, %v575
        %v605 = vsel %vm603, %v602, %v576
        %vm606 = vcmask 1045504
        %v607 = vsel %vm606, %v604, %v581
        %v608 = vsel %vm606, %v605, %v582
        %vm609 = vcmask 1046528
        %v610 = vsel %vm609, %v607, %v587
        %v611 = vsel %vm609, %v608, %v588
        %v612 = vsel %vm591, %v553, 0.0
        %v613 = vsel %vm591, %v554, 0.0
        %615 = vset.pattern.permute.xlu0 0
        %616 = vperm.xlu0 %615, %v470
        %v617 = vpop.permute.xlu0 %616
        %vm619 = vcmask 130048
        %v621 = vsel %vm619, %v469, 0
        %623 = vmatprep.subr.mxu0 %v611
        %624 = vmatpush1.msra.mxu0 %v610
        %625 = vmatprep.subr.mxu0 %v613
        %626 = vmatpush1.msra.mxu0 %v612
        %627 = vmatprep.subr.mxu0 0.0
        %628 = vmatpush1.msra.mxu0 0.0
        %629 = vmatprep.subr.mxu0 0.0
        %630 = vmatpush1.msra.mxu0 0.0
        %631 = vmatprep.subr.mxu0 0.0
        %632 = vmatpush1.msra.mxu0 0.0
        %633 = vmatprep.subr.mxu0 0.0
        %634 = vmatpush1.msra.mxu0 0.0
        %635 = vmatprep.subr.mxu0 0.0
        %636 = vmatpush1.msra.mxu0 0.0
        %637 = vmatprep.subr.mxu0 0.0
        %638 = vmatpush1.msra.mxu0 0.0
        %639 = vmatprep.subr.mxu0 0.0
        %640 = vmatpush1.msra.mxu0 0.0
        %641 = vmatprep.subr.mxu0 0.0
        %642 = vmatpush1.msra.mxu0 0.0
        %643 = vmatprep.subr.mxu0 0.0
        %644 = vmatpush1.msra.mxu0 0.0
        %645 = vmatprep.subr.mxu0 0.0
        %646 = vmatpush1.msra.mxu0 0.0
        %647 = vmatprep.subr.mxu0 0.0
        %648 = vmatpush1.msra.mxu0 0.0
        %649 = vmatprep.subr.mxu0 0.0
        %650 = vmatpush1.msra.mxu0 0.0
        %651 = vmatprep.subr.mxu0 0.0
        %652 = vmatpush1.msra.mxu0 0.0
        %653 = vmatprep.subr.mxu0 0.0
        %654 = vmatpush1.msra.mxu0 0.0
        %655 = vmatprep.subr.mxu0 0.0
        %656 = vmatpush1.msra.mxu0 0.0
        %657 = vmatprep.subr.mxu0 0.0
        %658 = vmatpush1.msra.mxu0 0.0
        %659 = vmatprep.subr.mxu0 0.0
        %660 = vmatpush1.msra.mxu0 0.0
        %661 = vmatprep.subr.mxu0 0.0
        %662 = vmatpush1.msra.mxu0 0.0
        %663 = vmatprep.subr.mxu0 0.0
        %664 = vmatpush1.msra.mxu0 0.0
        %665 = vmatprep.subr.mxu0 0.0
        %666 = vmatpush1.msra.mxu0 0.0
        %667 = vmatprep.subr.mxu0 0.0
        %668 = vmatpush1.msra.mxu0 0.0
        %669 = vmatprep.subr.mxu0 0.0
        %670 = vmatpush1.msra.mxu0 0.0
        %671 = vmatprep.subr.mxu0 0.0
        %672 = vmatpush1.msra.mxu0 0.0
        %673 = vmatprep.subr.mxu0 0.0
        %674 = vmatpush1.msra.mxu0 0.0
        %675 = vmatprep.subr.mxu0 0.0
        %676 = vmatpush1.msra.mxu0 0.0
        %677 = vmatprep.subr.mxu0 0.0
        %678 = vmatpush1.msra.mxu0 0.0
        %679 = vmatprep.subr.mxu0 0.0
        %680 = vmatpush1.msra.mxu0 0.0
        %681 = vmatprep.subr.mxu0 0.0
        %682 = vmatpush1.msra.mxu0 0.0
        %683 = vmatprep.subr.mxu0 0.0
        %684 = vmatpush1.msra.mxu0 0.0
        %685 = vmatprep.subr.mxu0 0.0
        %686 = vmatpush1.msra.mxu0 0.0
        %687 = vmatprep.mubr.f32.mxu0 0.0
        %688 = vmatmul.mubr.f32.gmra.mrb[0].mxu0 %v621
        %v689 = vpop.f32.mrb[0].mxu0
        %v690 = vadd.f32 %v617, %v689
        %v691 = vpop.f32.mrb[0].mxu0
        %v692 = vadd.f32 %v617, %v691
        %693 = vdwg.mxu0
        %vm694 = vcmp.ge.f32.partialorder %v690, 0.0
        %vm695 = vcmp.ge.f32.partialorder %v692, 0.0
        %v696 = vstv %s471
        %v697 = vmul.f32 %v696, %v690
        %v698 = vmul.f32 %v696, %v692
        %v699 = vsel %vm694, %v690, %v697
        %v700 = vsel %vm695, %v692, %v698
        loop: start=0, step=1, limit=9
        $region73: #{srgan_forward_pallas.1} parent=67 // loop_pre_header
          _
        $region74: #{srgan_forward_pallas.1} parent=67 // loop_header
          %s702 = sphi 0, %s706
          %p703 = scmp.ge.s32.totalorder %s702, 9
          %v707 = vphi %v699, %v1047
          %v708 = vphi %v700, %v1048
        $region75: #{srgan_forward_pallas.1} parent=67 // loop_header_branch
          %705 = sbr.rel (%p703) target = $region79
        $region76: #{srgan_forward_pallas.1} parent=67 // loop_body
          %s709 = smul.u32 %s702, 16
          %s710 = scalar_lea.vmem %s4, %s709
          %v711 = vld [vmem:[%s710] sm:$0xff]
          %s712 = scalar_lea.vmem %s5, %s709
          %v713 = vld [vmem:[%s712] sm:$0xff]
          %s714 = sadd.s32 %s702, 1
          %s715 = sld [smem:[#allocation2 + %s714]]
          %716 = vrot.lane.b32.xlu0 %v707, 17
          %v717 = vpop.permute.xlu0 %716
          %718 = vrot.lane.b32.xlu0 %v708, 17
          %v719 = vpop.permute.xlu0 %718
          %v720 = vsel %vm487, %v717, %v719
          %v721 = vsel %vm487, %v719, %v717
          %v722 = vsel %vm460, 1, 0
          %v723 = vsel %vm461, 1, 0
          %vm724 = vcmp.eq.s32.totalorder %v722, 1
          %vm725 = vcmp.eq.s32.totalorder %v723, 1
          %v726 = vsel %vm724, %v721, 0.0
          %v727 = vsel %vm725, %v720, 0.0
          %728 = vrot.lane.b32.xlu0 %v707, 16
          %v729 = vpop.permute.xlu0 %728
          %730 = vrot.lane.b32.xlu0 %v708, 16
          %v731 = vpop.permute.xlu0 %730
          %v732 = vsel %vm496, %v729, %v731
          %v733 = vsel %vm496, %v731, %v729
          %v734 = vsel %vm456, 1, 0
          %v735 = vsel %vm457, 1, 0
          %vm736 = vcmp.eq.s32.totalorder %v734, 1
          %vm737 = vcmp.eq.s32.totalorder %v735, 1
          %v738 = vsel %vm736, %v733, 0.0
          %v739 = vsel %vm737, %v732, 0.0
          %740 = vrot.lane.b32.xlu0 %v707, 15
          %v741 = vpop.permute.xlu0 %740
          %742 = vrot.lane.b32.xlu0 %v708, 15
          %v743 = vpop.permute.xlu0 %742
          %v744 = vsel %vm505, %v741, %v743
          %v745 = vsel %vm505, %v743, %v741
          %v746 = vsel %vm462, 1, 0
          %v747 = vsel %vm463, 1, 0
          %vm748 = vcmp.eq.s32.totalorder %v746, 1
          %vm749 = vcmp.eq.s32.totalorder %v747, 1
          %v750 = vsel %vm748, %v745, 0.0
          %v751 = vsel %vm749, %v744, 0.0
          %752 = vrot.lane.b32.xlu0 %v707, 1
          %v753 = vpop.permute.xlu0 %752
          %754 = vrot.lane.b32.xlu0 %v708, 1
          %v755 = vpop.permute.xlu0 %754
          %v756 = vsel %vm514, %v753, %v755
          %v757 = vsel %vm514, %v755, %v753
          %v758 = vsel %vm452, 1, 0
          %v759 = vsel %vm453, 1, 0
          %vm760 = vcmp.eq.s32.totalorder %v758, 1
          %vm761 = vcmp.eq.s32.totalorder %v759, 1
          %v762 = vsel %vm760, %v757, 0.0
          %v763 = vsel %vm761, %v756, 0.0
          %764 = vrot.lane.b32.xlu0 %v707, 127
          %v765 = vpop.permute.xlu0 %764
          %766 = vrot.lane.b32.xlu0 %v708, 127
          %v767 = vpop.permute.xlu0 %766
          %v768 = vsel %vm523, %v765, %v767
          %v769 = vsel %vm523, %v767, %v765
          %v770 = vsel %vm454, 1, 0
          %v771 = vsel %vm455, 1, 0
          %vm772 = vcmp.eq.s32.totalorder %v770, 1
          %vm773 = vcmp.eq.s32.totalorder %v771, 1
          %v774 = vsel %vm772, %v768, 0.0
          %v775 = vsel %vm773, %v769, 0.0
          %776 = vrot.lane.b32.xlu0 %v707, 113
          %v777 = vpop.permute.xlu0 %776
          %778 = vrot.lane.b32.xlu0 %v708, 113
          %v779 = vpop.permute.xlu0 %778
          %v780 = vsel %vm532, %v777, %v779
          %v781 = vsel %vm532, %v779, %v777
          %v782 = vsel %vm464, 1, 0
          %v783 = vsel %vm465, 1, 0
          %vm784 = vcmp.eq.s32.totalorder %v782, 1
          %vm785 = vcmp.eq.s32.totalorder %v783, 1
          %v786 = vsel %vm784, %v780, 0.0
          %v787 = vsel %vm785, %v781, 0.0
          %788 = vrot.lane.b32.xlu0 %v707, 112
          %v789 = vpop.permute.xlu0 %788
          %790 = vrot.lane.b32.xlu0 %v708, 112
          %v791 = vpop.permute.xlu0 %790
          %v792 = vsel %vm541, %v789, %v791
          %v793 = vsel %vm541, %v791, %v789
          %v794 = vsel %vm458, 1, 0
          %v795 = vsel %vm459, 1, 0
          %vm796 = vcmp.eq.s32.totalorder %v794, 1
          %vm797 = vcmp.eq.s32.totalorder %v795, 1
          %v798 = vsel %vm796, %v792, 0.0
          %v799 = vsel %vm797, %v793, 0.0
          %800 = vrot.lane.b32.xlu0 %v707, 111
          %v801 = vpop.permute.xlu0 %800
          %802 = vrot.lane.b32.xlu0 %v708, 111
          %v803 = vpop.permute.xlu0 %802
          %v804 = vsel %vm550, %v801, %v803
          %v805 = vsel %vm550, %v803, %v801
          %v806 = vsel %vm466, 1, 0
          %v807 = vsel %vm467, 1, 0
          %vm808 = vcmp.eq.s32.totalorder %v806, 1
          %vm809 = vcmp.eq.s32.totalorder %v807, 1
          %v810 = vsel %vm808, %v804, 0.0
          %v811 = vsel %vm809, %v805, 0.0
          %813 = vset.pattern.permute.xlu0 0
          %814 = vperm.xlu0 %813, %v713
          %v815 = vpop.permute.xlu0 %814
          %vm817 = vcmask 588800
          %v819 = vsel %vm817, %v711, 0
          %821 = vmatprep.subr.mxu0 %v727
          %822 = vmatpush1.msra.mxu0 %v726
          %823 = vmatprep.subr.mxu0 %v739
          %824 = vmatpush1.msra.mxu0 %v738
          %825 = vmatprep.subr.mxu0 %v751
          %826 = vmatpush1.msra.mxu0 %v750
          %827 = vmatprep.subr.mxu0 %v763
          %828 = vmatpush1.msra.mxu0 %v762
          %829 = vmatprep.subr.mxu0 %v708
          %830 = vmatpush1.msra.mxu0 %v707
          %831 = vmatprep.subr.mxu0 %v775
          %832 = vmatpush1.msra.mxu0 %v774
          %833 = vmatprep.subr.mxu0 %v787
          %834 = vmatpush1.msra.mxu0 %v786
          %835 = vmatprep.subr.mxu0 %v799
          %836 = vmatpush1.msra.mxu0 %v798
          %837 = vmatprep.subr.mxu0 %v811
          %838 = vmatpush1.msra.mxu0 %v810
          %839 = vmatprep.subr.mxu0 0.0
          %840 = vmatpush1.msra.mxu0 0.0
          %841 = vmatprep.subr.mxu0 0.0
          %842 = vmatpush1.msra.mxu0 0.0
          %843 = vmatprep.subr.mxu0 0.0
          %844 = vmatpush1.msra.mxu0 0.0
          %845 = vmatprep.subr.mxu0 0.0
          %846 = vmatpush1.msra.mxu0 0.0
          %847 = vmatprep.subr.mxu0 0.0
          %848 = vmatpush1.msra.mxu0 0.0
          %849 = vmatprep.subr.mxu0 0.0
          %850 = vmatpush1.msra.mxu0 0.0
          %851 = vmatprep.subr.mxu0 0.0
          %852 = vmatpush1.msra.mxu0 0.0
          %853 = vmatprep.subr.mxu0 0.0
          %854 = vmatpush1.msra.mxu0 0.0
          %855 = vmatprep.subr.mxu0 0.0
          %856 = vmatpush1.msra.mxu0 0.0
          %857 = vmatprep.subr.mxu0 0.0
          %858 = vmatpush1.msra.mxu0 0.0
          %859 = vmatprep.subr.mxu0 0.0
          %860 = vmatpush1.msra.mxu0 0.0
          %861 = vmatprep.subr.mxu0 0.0
          %862 = vmatpush1.msra.mxu0 0.0
          %863 = vmatprep.subr.mxu0 0.0
          %864 = vmatpush1.msra.mxu0 0.0
          %865 = vmatprep.subr.mxu0 0.0
          %866 = vmatpush1.msra.mxu0 0.0
          %867 = vmatprep.subr.mxu0 0.0
          %868 = vmatpush1.msra.mxu0 0.0
          %869 = vmatprep.subr.mxu0 0.0
          %870 = vmatpush1.msra.mxu0 0.0
          %871 = vmatprep.subr.mxu0 0.0
          %872 = vmatpush1.msra.mxu0 0.0
          %873 = vmatprep.subr.mxu0 0.0
          %874 = vmatpush1.msra.mxu0 0.0
          %875 = vmatprep.subr.mxu0 0.0
          %876 = vmatpush1.msra.mxu0 0.0
          %877 = vmatprep.subr.mxu0 0.0
          %878 = vmatpush1.msra.mxu0 0.0
          %879 = vmatprep.subr.mxu0 0.0
          %880 = vmatpush1.msra.mxu0 0.0
          %881 = vmatprep.subr.mxu0 0.0
          %882 = vmatpush1.msra.mxu0 0.0
          %883 = vmatprep.subr.mxu0 0.0
          %884 = vmatpush1.msra.mxu0 0.0
          %885 = vmatprep.mubr.f32.mxu0 0.0
          %886 = vmatmul.mubr.f32.gmra.mrb[0].mxu0 %v819
          %v887 = vpop.f32.mrb[0].mxu0
          %v888 = vadd.f32 %v815, %v887
          %v889 = vpop.f32.mrb[0].mxu0
          %v890 = vadd.f32 %v815, %v889
          %891 = vdwg.mxu0
          %vm892 = vcmp.ge.f32.partialorder %v888, 0.0
          %vm893 = vcmp.ge.f32.partialorder %v890, 0.0
          %v894 = vstv %s715
          %v895 = vmul.f32 %v894, %v888
          %v896 = vmul.f32 %v894, %v890
          %v897 = vsel %vm892, %v888, %v895
          %v898 = vsel %vm893, %v890, %v896
          %s899 = sadd.s32 8, %s709
          %s900 = scalar_lea.vmem %s4, %s899
          %v901 = vld [vmem:[%s900] sm:$0xff]
          %s902 = scalar_lea.vmem %s5, %s899
          %v903 = vld [vmem:[%s902] sm:$0xff]
          %904 = vrot.lane.b32.xlu0 %v897, 17
          %v905 = vpop.permute.xlu0 %904
          %906 = vrot.lane.b32.xlu0 %v898, 17
          %v907 = vpop.permute.xlu0 %906
          %v908 = vsel %vm487, %v905, %v907
          %v909 = vsel %vm487, %v907, %v905
          %v910 = vsel %vm724, %v909, 0.0
          %v911 = vsel %vm725, %v908, 0.0
          %912 = vrot.lane.b32.xlu0 %v897, 16
          %v913 = vpop.permute.xlu0 %912
          %914 = vrot.lane.b32.xlu0 %v898, 16
          %v915 = vpop.permute.xlu0 %914
          %v916 = vsel %vm496, %v913, %v915
          %v917 = vsel %vm496, %v915, %v913
          %v918 = vsel %vm736, %v917, 0.0
          %v919 = vsel %vm737, %v916, 0.0
          %920 = vrot.lane.b32.xlu0 %v897, 15
          %v921 = vpop.permute.xlu0 %920
          %922 = vrot.lane.b32.xlu0 %v898, 15
          %v923 = vpop.permute.xlu0 %922
          %v924 = vsel %vm505, %v921, %v923
          %v925 = vsel %vm505, %v923, %v921
          %v926 = vsel %vm748, %v925, 0.0
          %v927 = vsel %vm749, %v924, 0.0
          %928 = vrot.lane.b32.xlu0 %v897, 1
          %v929 = vpop.permute.xlu0 %928
          %930 = vrot.lane.b32.xlu0 %v898, 1
          %v931 = vpop.permute.xlu0 %930
          %v932 = vsel %vm514, %v929, %v931
          %v933 = vsel %vm514, %v931, %v929
          %v934 = vsel %vm760, %v933, 0.0
          %v935 = vsel %vm761, %v932, 0.0
          %936 = vrot.lane.b32.xlu0 %v897, 127
          %v937 = vpop.permute.xlu0 %936
          %938 = vrot.lane.b32.xlu0 %v898, 127
          %v939 = vpop.permute.xlu0 %938
          %v940 = vsel %vm523, %v937, %v939
          %v941 = vsel %vm523, %v939, %v937
          %v942 = vsel %vm772, %v940, 0.0
          %v943 = vsel %vm773, %v941, 0.0
          %944 = vrot.lane.b32.xlu0 %v897, 113
          %v945 = vpop.permute.xlu0 %944
          %946 = vrot.lane.b32.xlu0 %v898, 113
          %v947 = vpop.permute.xlu0 %946
          %v948 = vsel %vm532, %v945, %v947
          %v949 = vsel %vm532, %v947, %v945
          %v950 = vsel %vm784, %v948, 0.0
          %v951 = vsel %vm785, %v949, 0.0
          %952 = vrot.lane.b32.xlu0 %v897, 112
          %v953 = vpop.permute.xlu0 %952
          %954 = vrot.lane.b32.xlu0 %v898, 112
          %v955 = vpop.permute.xlu0 %954
          %v956 = vsel %vm541, %v953, %v955
          %v957 = vsel %vm541, %v955, %v953
          %v958 = vsel %vm796, %v956, 0.0
          %v959 = vsel %vm797, %v957, 0.0
          %960 = vrot.lane.b32.xlu0 %v897, 111
          %v961 = vpop.permute.xlu0 %960
          %962 = vrot.lane.b32.xlu0 %v898, 111
          %v963 = vpop.permute.xlu0 %962
          %v964 = vsel %vm550, %v961, %v963
          %v965 = vsel %vm550, %v963, %v961
          %v966 = vsel %vm808, %v964, 0.0
          %v967 = vsel %vm809, %v965, 0.0
          %969 = vset.pattern.permute.xlu0 0
          %970 = vperm.xlu0 %969, %v903
          %v971 = vpop.permute.xlu0 %970
          %v974 = vsel %vm817, %v901, 0
          %976 = vmatprep.subr.mxu0 %v911
          %977 = vmatpush1.msra.mxu0 %v910
          %978 = vmatprep.subr.mxu0 %v919
          %979 = vmatpush1.msra.mxu0 %v918
          %980 = vmatprep.subr.mxu0 %v927
          %981 = vmatpush1.msra.mxu0 %v926
          %982 = vmatprep.subr.mxu0 %v935
          %983 = vmatpush1.msra.mxu0 %v934
          %984 = vmatprep.subr.mxu0 %v898
          %985 = vmatpush1.msra.mxu0 %v897
          %986 = vmatprep.subr.mxu0 %v943
          %987 = vmatpush1.msra.mxu0 %v942
          %988 = vmatprep.subr.mxu0 %v951
          %989 = vmatpush1.msra.mxu0 %v950
          %990 = vmatprep.subr.mxu0 %v959
          %991 = vmatpush1.msra.mxu0 %v958
          %992 = vmatprep.subr.mxu0 %v967
          %993 = vmatpush1.msra.mxu0 %v966
          %994 = vmatprep.subr.mxu0 0.0
          %995 = vmatpush1.msra.mxu0 0.0
          %996 = vmatprep.subr.mxu0 0.0
          %997 = vmatpush1.msra.mxu0 0.0
          %998 = vmatprep.subr.mxu0 0.0
          %999 = vmatpush1.msra.mxu0 0.0
          %1000 = vmatprep.subr.mxu0 0.0
          %1001 = vmatpush1.msra.mxu0 0.0
          %1002 = vmatprep.subr.mxu0 0.0
          %1003 = vmatpush1.msra.mxu0 0.0
          %1004 = vmatprep.subr.mxu0 0.0
          %1005 = vmatpush1.msra.mxu0 0.0
          %1006 = vmatprep.subr.mxu0 0.0
          %1007 = vmatpush1.msra.mxu0 0.0
          %1008 = vmatprep.subr.mxu0 0.0
          %1009 = vmatpush1.msra.mxu0 0.0
          %1010 = vmatprep.subr.mxu0 0.0
          %1011 = vmatpush1.msra.mxu0 0.0
          %1012 = vmatprep.subr.mxu0 0.0
          %1013 = vmatpush1.msra.mxu0 0.0
          %1014 = vmatprep.subr.mxu0 0.0
          %1015 = vmatpush1.msra.mxu0 0.0
          %1016 = vmatprep.subr.mxu0 0.0
          %1017 = vmatpush1.msra.mxu0 0.0
          %1018 = vmatprep.subr.mxu0 0.0
          %1019 = vmatpush1.msra.mxu0 0.0
          %1020 = vmatprep.subr.mxu0 0.0
          %1021 = vmatpush1.msra.mxu0 0.0
          %1022 = vmatprep.subr.mxu0 0.0
          %1023 = vmatpush1.msra.mxu0 0.0
          %1024 = vmatprep.subr.mxu0 0.0
          %1025 = vmatpush1.msra.mxu0 0.0
          %1026 = vmatprep.subr.mxu0 0.0
          %1027 = vmatpush1.msra.mxu0 0.0
          %1028 = vmatprep.subr.mxu0 0.0
          %1029 = vmatpush1.msra.mxu0 0.0
          %1030 = vmatprep.subr.mxu0 0.0
          %1031 = vmatpush1.msra.mxu0 0.0
          %1032 = vmatprep.subr.mxu0 0.0
          %1033 = vmatpush1.msra.mxu0 0.0
          %1034 = vmatprep.subr.mxu0 0.0
          %1035 = vmatpush1.msra.mxu0 0.0
          %1036 = vmatprep.subr.mxu0 0.0
          %1037 = vmatpush1.msra.mxu0 0.0
          %1038 = vmatprep.subr.mxu0 0.0
          %1039 = vmatpush1.msra.mxu0 0.0
          %1040 = vmatprep.mubr.f32.mxu0 0.0
          %1041 = vmatmul.mubr.f32.gmra.mrb[0].mxu0 %v974
          %v1042 = vpop.f32.mrb[0].mxu0
          %v1043 = vadd.f32 %v971, %v1042
          %v1044 = vpop.f32.mrb[0].mxu0
          %v1045 = vadd.f32 %v971, %v1044
          %1046 = vdwg.mxu0
          %v1047 = vadd.f32 %v1043, %v707
          %v1048 = vadd.f32 %v1045, %v708
        $region77: #{srgan_forward_pallas.1} parent=67 // loop_footer
          %s706 = sadd.s32 1, %s702
        $region78: #{srgan_forward_pallas.1} parent=67 // loop_footer_branch
          %701 = sbr.rel target = $region74
        $region79: #{srgan_forward_pallas.1} parent=67 // loop_exit
          _
        %v1049 = vadd.f32 %v707, %v699
        %v1050 = vadd.f32 %v708, %v700
        %v1051 = vld [vmem:[%s6] sm:$0xff]
        %v1052 = vld [vmem:[%s6 + $0x8] sm:$0xff]
        %v1053 = vld [vmem:[%s7] sm:$0xff]
        %v1054 = vld [vmem:[%s7 + $0x8] sm:$0xff]
        %s1055 = sld [smem:[#allocation2 + $0xa]]
        %1056 = vrot.lane.b32.xlu0 %v1049, 17
        %v1057 = vpop.permute.xlu0 %1056
        %1058 = vrot.lane.b32.xlu0 %v1050, 17
        %v1059 = vpop.permute.xlu0 %1058
        %v1060 = vsel %vm487, %v1057, %v1059
        %v1061 = vsel %vm487, %v1059, %v1057
        %v1062 = vsel %vm460, 1, 0
        %v1063 = vsel %vm461, 1, 0
        %vm1064 = vcmp.eq.s32.totalorder %v1062, 1
        %vm1065 = vcmp.eq.s32.totalorder %v1063, 1
        %v1066 = vsel %vm1064, %v1061, 0.0
        %v1067 = vsel %vm1065, %v1060, 0.0
        %1068 = vrot.lane.b32.xlu0 %v1049, 16
        %v1069 = vpop.permute.xlu0 %1068
        %1070 = vrot.lane.b32.xlu0 %v1050, 16
        %v1071 = vpop.permute.xlu0 %1070
        %v1072 = vsel %vm496, %v1069, %v1071
        %v1073 = vsel %vm496, %v1071, %v1069
        %v1074 = vsel %vm456, 1, 0
        %v1075 = vsel %vm457, 1, 0
        %vm1076 = vcmp.eq.s32.totalorder %v1074, 1
        %vm1077 = vcmp.eq.s32.totalorder %v1075, 1
        %v1078 = vsel %vm1076, %v1073, 0.0
        %v1079 = vsel %vm1077, %v1072, 0.0
        %1080 = vrot.lane.b32.xlu0 %v1049, 15
        %v1081 = vpop.permute.xlu0 %1080
        %1082 = vrot.lane.b32.xlu0 %v1050, 15
        %v1083 = vpop.permute.xlu0 %1082
        %v1084 = vsel %vm505, %v1081, %v1083
        %v1085 = vsel %vm505, %v1083, %v1081
        %v1086 = vsel %vm462, 1, 0
        %v1087 = vsel %vm463, 1, 0
        %vm1088 = vcmp.eq.s32.totalorder %v1086, 1
        %vm1089 = vcmp.eq.s32.totalorder %v1087, 1
        %v1090 = vsel %vm1088, %v1085, 0.0
        %v1091 = vsel %vm1089, %v1084, 0.0
        %1092 = vrot.lane.b32.xlu0 %v1049, 1
        %v1093 = vpop.permute.xlu0 %1092
        %1094 = vrot.lane.b32.xlu0 %v1050, 1
        %v1095 = vpop.permute.xlu0 %1094
        %v1096 = vsel %vm514, %v1093, %v1095
        %v1097 = vsel %vm514, %v1095, %v1093
        %v1098 = vsel %vm452, 1, 0
        %v1099 = vsel %vm453, 1, 0
        %vm1100 = vcmp.eq.s32.totalorder %v1098, 1
        %vm1101 = vcmp.eq.s32.totalorder %v1099, 1
        %v1102 = vsel %vm1100, %v1097, 0.0
        %v1103 = vsel %vm1101, %v1096, 0.0
        %1104 = vrot.lane.b32.xlu0 %v1049, 127
        %v1105 = vpop.permute.xlu0 %1104
        %1106 = vrot.lane.b32.xlu0 %v1050, 127
        %v1107 = vpop.permute.xlu0 %1106
        %v1108 = vsel %vm523, %v1105, %v1107
        %v1109 = vsel %vm523, %v1107, %v1105
        %v1110 = vsel %vm454, 1, 0
        %v1111 = vsel %vm455, 1, 0
        %vm1112 = vcmp.eq.s32.totalorder %v1110, 1
        %vm1113 = vcmp.eq.s32.totalorder %v1111, 1
        %v1114 = vsel %vm1112, %v1108, 0.0
        %v1115 = vsel %vm1113, %v1109, 0.0
        %1116 = vrot.lane.b32.xlu0 %v1049, 113
        %v1117 = vpop.permute.xlu0 %1116
        %1118 = vrot.lane.b32.xlu0 %v1050, 113
        %v1119 = vpop.permute.xlu0 %1118
        %v1120 = vsel %vm532, %v1117, %v1119
        %v1121 = vsel %vm532, %v1119, %v1117
        %v1122 = vsel %vm464, 1, 0
        %v1123 = vsel %vm465, 1, 0
        %vm1124 = vcmp.eq.s32.totalorder %v1122, 1
        %vm1125 = vcmp.eq.s32.totalorder %v1123, 1
        %v1126 = vsel %vm1124, %v1120, 0.0
        %v1127 = vsel %vm1125, %v1121, 0.0
        %1128 = vrot.lane.b32.xlu0 %v1049, 112
        %v1129 = vpop.permute.xlu0 %1128
        %1130 = vrot.lane.b32.xlu0 %v1050, 112
        %v1131 = vpop.permute.xlu0 %1130
        %v1132 = vsel %vm541, %v1129, %v1131
        %v1133 = vsel %vm541, %v1131, %v1129
        %v1134 = vsel %vm458, 1, 0
        %v1135 = vsel %vm459, 1, 0
        %vm1136 = vcmp.eq.s32.totalorder %v1134, 1
        %vm1137 = vcmp.eq.s32.totalorder %v1135, 1
        %v1138 = vsel %vm1136, %v1132, 0.0
        %v1139 = vsel %vm1137, %v1133, 0.0
        %1140 = vrot.lane.b32.xlu0 %v1049, 111
        %v1141 = vpop.permute.xlu0 %1140
        %1142 = vrot.lane.b32.xlu0 %v1050, 111
        %v1143 = vpop.permute.xlu0 %1142
        %v1144 = vsel %vm550, %v1141, %v1143
        %v1145 = vsel %vm550, %v1143, %v1141
        %v1146 = vsel %vm466, 1, 0
        %v1147 = vsel %vm467, 1, 0
        %vm1148 = vcmp.eq.s32.totalorder %v1146, 1
        %vm1149 = vcmp.eq.s32.totalorder %v1147, 1
        %v1150 = vsel %vm1148, %v1144, 0.0
        %v1151 = vsel %vm1149, %v1145, 0.0
        %1153 = vset.pattern.permute.xlu0 0
        %1154 = vperm.xlu0 %1153, %v1053
        %v1155 = vpop.permute.xlu0 %1154
        %1158 = vset.pattern.permute.xlu0 0
        %1159 = vperm.xlu0 %1158, %v1054
        %v1160 = vpop.permute.xlu0 %1159
        %vm1162 = vcmask 588800
        %v1164 = vsel %vm1162, %v1051, 0
        %v1167 = vsel %vm1162, %v1052, 0
        %1169 = vmatprep.subr.mxu0 %v1067
        %1170 = vmatpush1.msra.mxu0 %v1066
        %1171 = vmatprep.subr.mxu0 %v1079
        %1172 = vmatpush1.msra.mxu0 %v1078
        %1173 = vmatprep.subr.mxu0 %v1091
        %1174 = vmatpush1.msra.mxu0 %v1090
        %1175 = vmatprep.subr.mxu0 %v1103
        %1176 = vmatpush1.msra.mxu0 %v1102
        %1177 = vmatprep.subr.mxu0 %v1050
        %1178 = vmatpush1.msra.mxu0 %v1049
        %1179 = vmatprep.subr.mxu0 %v1115
        %1180 = vmatpush1.msra.mxu0 %v1114
        %1181 = vmatprep.subr.mxu0 %v1127
        %1182 = vmatpush1.msra.mxu0 %v1126
        %1183 = vmatprep.subr.mxu0 %v1139
        %1184 = vmatpush1.msra.mxu0 %v1138
        %1185 = vmatprep.subr.mxu0 %v1151
        %1186 = vmatpush1.msra.mxu0 %v1150
        %1187 = vmatprep.subr.mxu0 0.0
        %1188 = vmatpush1.msra.mxu0 0.0
        %1189 = vmatprep.subr.mxu0 0.0
        %1190 = vmatpush1.msra.mxu0 0.0
        %1191 = vmatprep.subr.mxu0 0.0
        %1192 = vmatpush1.msra.mxu0 0.0
        %1193 = vmatprep.subr.mxu0 0.0
        %1194 = vmatpush1.msra.mxu0 0.0
        %1195 = vmatprep.subr.mxu0 0.0
        %1196 = vmatpush1.msra.mxu0 0.0
        %1197 = vmatprep.subr.mxu0 0.0
        %1198 = vmatpush1.msra.mxu0 0.0
        %1199 = vmatprep.subr.mxu0 0.0
        %1200 = vmatpush1.msra.mxu0 0.0
        %1201 = vmatprep.subr.mxu0 0.0
        %1202 = vmatpush1.msra.mxu0 0.0
        %1203 = vmatprep.subr.mxu0 0.0
        %1204 = vmatpush1.msra.mxu0 0.0
        %1205 = vmatprep.subr.mxu0 0.0
        %1206 = vmatpush1.msra.mxu0 0.0
        %1207 = vmatprep.subr.mxu0 0.0
        %1208 = vmatpush1.msra.mxu0 0.0
        %1209 = vmatprep.subr.mxu0 0.0
        %1210 = vmatpush1.msra.mxu0 0.0
        %1211 = vmatprep.subr.mxu0 0.0
        %1212 = vmatpush1.msra.mxu0 0.0
        %1213 = vmatprep.subr.mxu0 0.0
        %1214 = vmatpush1.msra.mxu0 0.0
        %1215 = vmatprep.subr.mxu0 0.0
        %1216 = vmatpush1.msra.mxu0 0.0
        %1217 = vmatprep.subr.mxu0 0.0
        %1218 = vmatpush1.msra.mxu0 0.0
        %1219 = vmatprep.subr.mxu0 0.0
        %1220 = vmatpush1.msra.mxu0 0.0
        %1221 = vmatprep.subr.mxu0 0.0
        %1222 = vmatpush1.msra.mxu0 0.0
        %1223 = vmatprep.subr.mxu0 0.0
        %1224 = vmatpush1.msra.mxu0 0.0
        %1225 = vmatprep.subr.mxu0 0.0
        %1226 = vmatpush1.msra.mxu0 0.0
        %1227 = vmatprep.subr.mxu0 0.0
        %1228 = vmatpush1.msra.mxu0 0.0
        %1229 = vmatprep.subr.mxu0 0.0
        %1230 = vmatpush1.msra.mxu0 0.0
        %1231 = vmatprep.subr.mxu0 0.0
        %1232 = vmatpush1.msra.mxu0 0.0
        %1233 = vmatprep.mubr.f32.mxu0 0.0
        %1234 = vmatmul.mubr.f32.gmra.mrb[0].mxu0 %v1164
        %v1235 = vpop.f32.mrb[0].mxu0
        %v1236 = vadd.f32 %v1155, %v1235
        %v1237 = vpop.f32.mrb[0].mxu0
        %v1238 = vadd.f32 %v1155, %v1237
        %1239 = vmatprep.mubr.f32.mxu0 0.0
        %1240 = vmatmul.mubr.f32.gmra.mrb[0].mxu0 %v1167
        %v1241 = vpop.f32.mrb[0].mxu0
        %v1242 = vadd.f32 %v1160, %v1241
        %v1243 = vpop.f32.mrb[0].mxu0
        %v1244 = vadd.f32 %v1160, %v1243
        %1245 = vdwg.mxu0
        %vm1246 = vcmp.ge.f32.partialorder %v1236, 0.0
        %vm1247 = vcmp.ge.f32.partialorder %v1238, 0.0
        %vm1248 = vcmp.ge.f32.partialorder %v1242, 0.0
        %vm1249 = vcmp.ge.f32.partialorder %v1244, 0.0
        %v1250 = vstv %s1055
        %v1251 = vmul.f32 %v1250, %v1236
        %v1252 = vmul.f32 %v1250, %v1238
        %v1253 = vmul.f32 %v1250, %v1242
        %v1254 = vmul.f32 %v1250, %v1244
        %v1255 = vsel %vm1246, %v1236, %v1251
        %v1256 = vsel %vm1247, %v1238, %v1252
        %v1257 = vsel %vm1248, %v1242, %v1253
        %v1258 = vsel %vm1249, %v1244, %v1254
        %v1259 = vld [vmem:[%s8] sm:$0xff]
        %v1260 = vld [vmem:[%s8 + $0x8] sm:$0xff]
        %v1261 = vld [vmem:[%s8 + $0x10] sm:$0xff]
        %v1262 = vld [vmem:[%s8 + $0x18] sm:$0xff]
        %v1263 = vld [vmem:[%s8 + $0x20] sm:$0xff]
        %v1264 = vld [vmem:[%s8 + $0x28] sm:$0xff]
        %v1265 = vld [vmem:[%s8 + $0x30] sm:$0xff]
        %v1266 = vld [vmem:[%s8 + $0x38] sm:$0xff]
        %v1267 = vld [vmem:[%s9] sm:$0xff]
        %v1268 = vld [vmem:[%s9 + $0x8] sm:$0xff]
        %v1269 = vld [vmem:[%s9 + $0x10] sm:$0xff]
        %v1270 = vld [vmem:[%s9 + $0x18] sm:$0xff]
        %s1271 = sld [smem:[#allocation2 + $0xb]]
        %1272 = vrot.lane.b32.xlu0 %v1255, 17
        %v1273 = vpop.permute.xlu0 %1272
        %1274 = vrot.lane.b32.xlu0 %v1257, 17
        %v1275 = vpop.permute.xlu0 %1274
        %1276 = vrot.lane.b32.xlu0 %v1256, 17
        %v1277 = vpop.permute.xlu0 %1276
        %1278 = vrot.lane.b32.xlu0 %v1258, 17
        %v1279 = vpop.permute.xlu0 %1278
        %v1280 = vsel %vm487, %v1273, %v1277
        %v1281 = vsel %vm487, %v1275, %v1279
        %v1282 = vsel %vm487, %v1277, %v1273
        %v1283 = vsel %vm487, %v1279, %v1275
        %v1284 = vsel %vm1064, %v1282, 0.0
        %v1285 = vsel %vm1065, %v1280, 0.0
        %v1286 = vsel %vm1064, %v1283, 0.0
        %v1287 = vsel %vm1065, %v1281, 0.0
        %1288 = vrot.lane.b32.xlu0 %v1255, 16
        %v1289 = vpop.permute.xlu0 %1288
        %1290 = vrot.lane.b32.xlu0 %v1257, 16
        %v1291 = vpop.permute.xlu0 %1290
        %1292 = vrot.lane.b32.xlu0 %v1256, 16
        %v1293 = vpop.permute.xlu0 %1292
        %1294 = vrot.lane.b32.xlu0 %v1258, 16
        %v1295 = vpop.permute.xlu0 %1294
        %v1296 = vsel %vm496, %v1289, %v1293
        %v1297 = vsel %vm496, %v1291, %v1295
        %v1298 = vsel %vm496, %v1293, %v1289
        %v1299 = vsel %vm496, %v1295, %v1291
        %v1300 = vsel %vm1076, %v1298, 0.0
        %v1301 = vsel %vm1077, %v1296, 0.0
        %v1302 = vsel %vm1076, %v1299, 0.0
        %v1303 = vsel %vm1077, %v1297, 0.0
        %1304 = vrot.lane.b32.xlu0 %v1255, 15
        %v1305 = vpop.permute.xlu0 %1304
        %1306 = vrot.lane.b32.xlu0 %v1257, 15
        %v1307 = vpop.permute.xlu0 %1306
        %1308 = vrot.lane.b32.xlu0 %v1256, 15
        %v1309 = vpop.permute.xlu0 %1308
        %1310 = vrot.lane.b32.xlu0 %v1258, 15
        %v1311 = vpop.permute.xlu0 %1310
        %v1312 = vsel %vm505, %v1305, %v1309
        %v1313 = vsel %vm505, %v1307, %v1311
        %v1314 = vsel %vm505, %v1309, %v1305
        %v1315 = vsel %vm505, %v1311, %v1307
        %v1316 = vsel %vm1088, %v1314, 0.0
        %v1317 = vsel %vm1089, %v1312, 0.0
        %v1318 = vsel %vm1088, %v1315, 0.0
        %v1319 = vsel %vm1089, %v1313, 0.0
        %1320 = vrot.lane.b32.xlu0 %v1255, 1
        %v1321 = vpop.permute.xlu0 %1320
        %1322 = vrot.lane.b32.xlu0 %v1257, 1
        %v1323 = vpop.permute.xlu0 %1322
        %1324 = vrot.lane.b32.xlu0 %v1256, 1
        %v1325 = vpop.permute.xlu0 %1324
        %1326 = vrot.lane.b32.xlu0 %v1258, 1
        %v1327 = vpop.permute.xlu0 %1326
        %v1328 = vsel %vm514, %v1321, %v1325
        %v1329 = vsel %vm514, %v1323, %v1327
        %v1330 = vsel %vm514, %v1325, %v1321
        %v1331 = vsel %vm514, %v1327, %v1323
        %v1332 = vsel %vm1100, %v1330, 0.0
        %v1333 = vsel %vm1101, %v1328, 0.0
        %v1334 = vsel %vm1100, %v1331, 0.0
        %v1335 = vsel %vm1101, %v1329, 0.0
        %1336 = vrot.lane.b32.xlu0 %v1255, 127
        %v1337 = vpop.permute.xlu0 %1336
        %1338 = vrot.lane.b32.xlu0 %v1257, 127
        %v1339 = vpop.permute.xlu0 %1338
        %1340 = vrot.lane.b32.xlu0 %v1256, 127
        %v1341 = vpop.permute.xlu0 %1340
        %1342 = vrot.lane.b32.xlu0 %v1258, 127
        %v1343 = vpop.permute.xlu0 %1342
        %v1344 = vsel %vm523, %v1337, %v1341
        %v1345 = vsel %vm523, %v1339, %v1343
        %v1346 = vsel %vm523, %v1341, %v1337
        %v1347 = vsel %vm523, %v1343, %v1339
        %v1348 = vsel %vm1112, %v1344, 0.0
        %v1349 = vsel %vm1113, %v1346, 0.0
        %v1350 = vsel %vm1112, %v1345, 0.0
        %v1351 = vsel %vm1113, %v1347, 0.0
        %1352 = vrot.lane.b32.xlu0 %v1255, 113
        %v1353 = vpop.permute.xlu0 %1352
        %1354 = vrot.lane.b32.xlu0 %v1257, 113
        %v1355 = vpop.permute.xlu0 %1354
        %1356 = vrot.lane.b32.xlu0 %v1256, 113
        %v1357 = vpop.permute.xlu0 %1356
        %1358 = vrot.lane.b32.xlu0 %v1258, 113
        %v1359 = vpop.permute.xlu0 %1358
        %v1360 = vsel %vm532, %v1353, %v1357
        %v1361 = vsel %vm532, %v1355, %v1359
        %v1362 = vsel %vm532, %v1357, %v1353
        %v1363 = vsel %vm532, %v1359, %v1355
        %v1364 = vsel %vm1124, %v1360, 0.0
        %v1365 = vsel %vm1125, %v1362, 0.0
        %v1366 = vsel %vm1124, %v1361, 0.0
        %v1367 = vsel %vm1125, %v1363, 0.0
        %1368 = vrot.lane.b32.xlu0 %v1255, 112
        %v1369 = vpop.permute.xlu0 %1368
        %1370 = vrot.lane.b32.xlu0 %v1257, 112
        %v1371 = vpop.permute.xlu0 %1370
        %1372 = vrot.lane.b32.xlu0 %v1256, 112
        %v1373 = vpop.permute.xlu0 %1372
        %1374 = vrot.lane.b32.xlu0 %v1258, 112
        %v1375 = vpop.permute.xlu0 %1374
        %v1376 = vsel %vm541, %v1369, %v1373
        %v1377 = vsel %vm541, %v1371, %v1375
        %v1378 = vsel %vm541, %v1373, %v1369
        %v1379 = vsel %vm541, %v1375, %v1371
        %v1380 = vsel %vm1136, %v1376, 0.0
        %v1381 = vsel %vm1137, %v1378, 0.0
        %v1382 = vsel %vm1136, %v1377, 0.0
        %v1383 = vsel %vm1137, %v1379, 0.0
        %1384 = vrot.lane.b32.xlu0 %v1255, 111
        %v1385 = vpop.permute.xlu0 %1384
        %1386 = vrot.lane.b32.xlu0 %v1257, 111
        %v1387 = vpop.permute.xlu0 %1386
        %1388 = vrot.lane.b32.xlu0 %v1256, 111
        %v1389 = vpop.permute.xlu0 %1388
        %1390 = vrot.lane.b32.xlu0 %v1258, 111
        %v1391 = vpop.permute.xlu0 %1390
        %v1392 = vsel %vm550, %v1385, %v1389
        %v1393 = vsel %vm550, %v1387, %v1391
        %v1394 = vsel %vm550, %v1389, %v1385
        %v1395 = vsel %vm550, %v1391, %v1387
        %v1396 = vsel %vm1148, %v1392, 0.0
        %v1397 = vsel %vm1149, %v1394, 0.0
        %v1398 = vsel %vm1148, %v1393, 0.0
        %v1399 = vsel %vm1149, %v1395, 0.0
        %1401 = vset.pattern.permute.xlu0 0
        %1402 = vperm.xlu0 %1401, %v1267
        %v1403 = vpop.permute.xlu0 %1402
        %1406 = vset.pattern.permute.xlu0 0
        %1407 = vperm.xlu0 %1406, %v1268
        %v1408 = vpop.permute.xlu0 %1407
        %1411 = vset.pattern.permute.xlu0 0
        %1412 = vperm.xlu0 %1411, %v1269
        %v1413 = vpop.permute.xlu0 %1412
        %1416 = vset.pattern.permute.xlu0 0
        %1417 = vperm.xlu0 %1416, %v1270
        %v1418 = vpop.permute.xlu0 %1417
        %v1421 = vsel %vm619, %v1260, 0
        %v1424 = vsel %vm619, %v1262, 0
        %v1427 = vsel %vm619, %v1264, 0
        %v1430 = vsel %vm619, %v1266, 0
        %1432 = vmatprep.subr.mxu0 %v1285
        %1433 = vmatpush1.msra.mxu0 %v1284
        %1434 = vmatprep.subr.mxu0 %v1287
        %1435 = vmatpush1.msra.mxu0 %v1286
        %1436 = vmatprep.subr.mxu0 %v1301
        %1437 = vmatpush1.msra.mxu0 %v1300
        %1438 = vmatprep.subr.mxu0 %v1303
        %1439 = vmatpush1.msra.mxu0 %v1302
        %1440 = vmatprep.subr.mxu0 %v1317
        %1441 = vmatpush1.msra.mxu0 %v1316
        %1442 = vmatprep.subr.mxu0 %v1319
        %1443 = vmatpush1.msra.mxu0 %v1318
        %1444 = vmatprep.subr.mxu0 %v1333
        %1445 = vmatpush1.msra.mxu0 %v1332
        %1446 = vmatprep.subr.mxu0 %v1335
        %1447 = vmatpush1.msra.mxu0 %v1334
        %1448 = vmatprep.subr.mxu0 %v1256
        %1449 = vmatpush1.msra.mxu0 %v1255
        %1450 = vmatprep.subr.mxu0 %v1258
        %1451 = vmatpush1.msra.mxu0 %v1257
        %1452 = vmatprep.subr.mxu0 %v1349
        %1453 = vmatpush1.msra.mxu0 %v1348
        %1454 = vmatprep.subr.mxu0 %v1351
        %1455 = vmatpush1.msra.mxu0 %v1350
        %1456 = vmatprep.subr.mxu0 %v1365
        %1457 = vmatpush1.msra.mxu0 %v1364
        %1458 = vmatprep.subr.mxu0 %v1367
        %1459 = vmatpush1.msra.mxu0 %v1366
        %1460 = vmatprep.subr.mxu0 %v1381
        %1461 = vmatpush1.msra.mxu0 %v1380
        %1462 = vmatprep.subr.mxu0 %v1383
        %1463 = vmatpush1.msra.mxu0 %v1382
        %1464 = vmatprep.subr.mxu0 %v1397
        %1465 = vmatpush1.msra.mxu0 %v1396
        %1466 = vmatprep.subr.mxu0 %v1399
        %1467 = vmatpush1.msra.mxu0 %v1398
        %1468 = vmatprep.subr.mxu0 0.0
        %1469 = vmatpush1.msra.mxu0 0.0
        %1470 = vmatprep.subr.mxu0 0.0
        %1471 = vmatpush1.msra.mxu0 0.0
        %1472 = vmatprep.subr.mxu0 0.0
        %1473 = vmatpush1.msra.mxu0 0.0
        %1474 = vmatprep.subr.mxu0 0.0
        %1475 = vmatpush1.msra.mxu0 0.0
        %1476 = vmatprep.subr.mxu0 0.0
        %1477 = vmatpush1.msra.mxu0 0.0
        %1478 = vmatprep.subr.mxu0 0.0
        %1479 = vmatpush1.msra.mxu0 0.0
        %1480 = vmatprep.subr.mxu0 0.0
        %1481 = vmatpush1.msra.mxu0 0.0
        %1482 = vmatprep.subr.mxu0 0.0
        %1483 = vmatpush1.msra.mxu0 0.0
        %1484 = vmatprep.subr.mxu0 0.0
        %1485 = vmatpush1.msra.mxu0 0.0
        %1486 = vmatprep.subr.mxu0 0.0
        %1487 = vmatpush1.msra.mxu0 0.0
        %1488 = vmatprep.subr.mxu0 0.0
        %1489 = vmatpush1.msra.mxu0 0.0
        %1490 = vmatprep.subr.mxu0 0.0
        %1491 = vmatpush1.msra.mxu0 0.0
        %1492 = vmatprep.subr.mxu0 0.0
        %1493 = vmatpush1.msra.mxu0 0.0
        %1494 = vmatprep.subr.mxu0 0.0
        %1495 = vmatpush1.msra.mxu0 0.0
        %1496 = vmatprep.mubr.f32.mxu0 %v1421
        %1497 = vmatmul.mubr.f32.gmra.mrb[0].mxu0 %v1259
        %v1498 = vpop.f32.mrb[0].mxu0
        %v1499 = vadd.f32 %v1403, %v1498
        %v1500 = vpop.f32.mrb[0].mxu0
        %v1501 = vadd.f32 %v1403, %v1500
        %1502 = vmatprep.mubr.f32.mxu0 %v1424
        %1503 = vmatmul.mubr.f32.gmra.mrb[0].mxu0 %v1261
        %v1504 = vpop.f32.mrb[0].mxu0
        %v1505 = vadd.f32 %v1408, %v1504
        %v1506 = vpop.f32.mrb[0].mxu0
        %v1507 = vadd.f32 %v1408, %v1506
        %1508 = vmatprep.mubr.f32.mxu0 %v1427
        %1509 = vmatmul.mubr.f32.gmra.mrb[0].mxu0 %v1263
        %v1510 = vpop.f32.mrb[0].mxu0
        %v1511 = vadd.f32 %v1413, %v1510
        %v1512 = vpop.f32.mrb[0].mxu0
        %v1513 = vadd.f32 %v1413, %v1512
        %1514 = vmatprep.mubr.f32.mxu0 %v1430
        %1515 = vmatmul.mubr.f32.gmra.mrb[0].mxu0 %v1265
        %v1516 = vpop.f32.mrb[0].mxu0
        %v1517 = vadd.f32 %v1418, %v1516
        %v1518 = vpop.f32.mrb[0].mxu0
        %v1519 = vadd.f32 %v1418, %v1518
        %1520 = vdwg.mxu0
        %vm1521 = vcmp.ge.f32.partialorder %v1499, 0.0
        %vm1522 = vcmp.ge.f32.partialorder %v1501, 0.0
        %vm1523 = vcmp.ge.f32.partialorder %v1505, 0.0
        %vm1524 = vcmp.ge.f32.partialorder %v1507, 0.0
        %vm1525 = vcmp.ge.f32.partialorder %v1511, 0.0
        %vm1526 = vcmp.ge.f32.partialorder %v1513, 0.0
        %vm1527 = vcmp.ge.f32.partialorder %v1517, 0.0
        %vm1528 = vcmp.ge.f32.partialorder %v1519, 0.0
        %v1529 = vstv %s1271
        %v1530 = vmul.f32 %v1529, %v1499
        %v1531 = vmul.f32 %v1529, %v1501
        %v1532 = vmul.f32 %v1529, %v1505
        %v1533 = vmul.f32 %v1529, %v1507
        %v1534 = vmul.f32 %v1529, %v1511
        %v1535 = vmul.f32 %v1529, %v1513
        %v1536 = vmul.f32 %v1529, %v1517
        %v1537 = vmul.f32 %v1529, %v1519
        %v1538 = vsel %vm1521, %v1499, %v1530
        %v1539 = vsel %vm1522, %v1501, %v1531
        %v1540 = vsel %vm1523, %v1505, %v1532
        %v1541 = vsel %vm1524, %v1507, %v1533
        %v1542 = vsel %vm1525, %v1511, %v1534
        %v1543 = vsel %vm1526, %v1513, %v1535
        %v1544 = vsel %vm1527, %v1517, %v1536
        %v1545 = vsel %vm1528, %v1519, %v1537
        %v1546 = vld [vmem:[%s10] sm:$0xff]
        %v1547 = vld [vmem:[%s10 + $0x8] sm:$0xf]
        %v1548 = vld [vmem:[%s11] sm:$0xf]
        %1549 = vrot.lane.b32.xlu0 %v1538, 17
        %v1550 = vpop.permute.xlu0 %1549
        %1551 = vrot.lane.b32.xlu0 %v1540, 17
        %v1552 = vpop.permute.xlu0 %1551
        %1553 = vrot.lane.b32.xlu0 %v1542, 17
        %v1554 = vpop.permute.xlu0 %1553
        %1555 = vrot.lane.b32.xlu0 %v1544, 17
        %v1556 = vpop.permute.xlu0 %1555
        %1557 = vrot.lane.b32.xlu0 %v1539, 17
        %v1558 = vpop.permute.xlu0 %1557
        %1559 = vrot.lane.b32.xlu0 %v1541, 17
        %v1560 = vpop.permute.xlu0 %1559
        %1561 = vrot.lane.b32.xlu0 %v1543, 17
        %v1562 = vpop.permute.xlu0 %1561
        %1563 = vrot.lane.b32.xlu0 %v1545, 17
        %v1564 = vpop.permute.xlu0 %1563
        %v1565 = vsel %vm487, %v1550, %v1558
        %v1566 = vsel %vm487, %v1552, %v1560
        %v1567 = vsel %vm487, %v1554, %v1562
        %v1568 = vsel %vm487, %v1556, %v1564
        %v1569 = vsel %vm487, %v1558, %v1550
        %v1570 = vsel %vm487, %v1560, %v1552
        %v1571 = vsel %vm487, %v1562, %v1554
        %v1572 = vsel %vm487, %v1564, %v1556
        %v1573 = vsel %vm1064, %v1569, 0.0
        %v1574 = vsel %vm1065, %v1565, 0.0
        %v1575 = vsel %vm1064, %v1570, 0.0
        %v1576 = vsel %vm1065, %v1566, 0.0
        %v1577 = vsel %vm1064, %v1571, 0.0
        %v1578 = vsel %vm1065, %v1567, 0.0
        %v1579 = vsel %vm1064, %v1572, 0.0
        %v1580 = vsel %vm1065, %v1568, 0.0
        %1581 = vrot.lane.b32.xlu0 %v1538, 16
        %v1582 = vpop.permute.xlu0 %1581
        %1583 = vrot.lane.b32.xlu0 %v1540, 16
        %v1584 = vpop.permute.xlu0 %1583
        %1585 = vrot.lane.b32.xlu0 %v1542, 16
        %v1586 = vpop.permute.xlu0 %1585
        %1587 = vrot.lane.b32.xlu0 %v1544, 16
        %v1588 = vpop.permute.xlu0 %1587
        %1589 = vrot.lane.b32.xlu0 %v1539, 16
        %v1590 = vpop.permute.xlu0 %1589
        %1591 = vrot.lane.b32.xlu0 %v1541, 16
        %v1592 = vpop.permute.xlu0 %1591
        %1593 = vrot.lane.b32.xlu0 %v1543, 16
        %v1594 = vpop.permute.xlu0 %1593
        %1595 = vrot.lane.b32.xlu0 %v1545, 16
        %v1596 = vpop.permute.xlu0 %1595
        %v1597 = vsel %vm496, %v1582, %v1590
        %v1598 = vsel %vm496, %v1584, %v1592
        %v1599 = vsel %vm496, %v1586, %v1594
        %v1600 = vsel %vm496, %v1588, %v1596
        %v1601 = vsel %vm496, %v1590, %v1582
        %v1602 = vsel %vm496, %v1592, %v1584
        %v1603 = vsel %vm496, %v1594, %v1586
        %v1604 = vsel %vm496, %v1596, %v1588
        %v1605 = vsel %vm1076, %v1601, 0.0
        %v1606 = vsel %vm1077, %v1597, 0.0
        %v1607 = vsel %vm1076, %v1602, 0.0
        %v1608 = vsel %vm1077, %v1598, 0.0
        %v1609 = vsel %vm1076, %v1603, 0.0
        %v1610 = vsel %vm1077, %v1599, 0.0
        %v1611 = vsel %vm1076, %v1604, 0.0
        %v1612 = vsel %vm1077, %v1600, 0.0
        %1613 = vrot.lane.b32.xlu0 %v1538, 15
        %v1614 = vpop.permute.xlu0 %1613
        %1615 = vrot.lane.b32.xlu0 %v1540, 15
        %v1616 = vpop.permute.xlu0 %1615
        %1617 = vrot.lane.b32.xlu0 %v1542, 15
        %v1618 = vpop.permute.xlu0 %1617
        %1619 = vrot.lane.b32.xlu0 %v1544, 15
        %v1620 = vpop.permute.xlu0 %1619
        %1621 = vrot.lane.b32.xlu0 %v1539, 15
        %v1622 = vpop.permute.xlu0 %1621
        %1623 = vrot.lane.b32.xlu0 %v1541, 15
        %v1624 = vpop.permute.xlu0 %1623
        %1625 = vrot.lane.b32.xlu0 %v1543, 15
        %v1626 = vpop.permute.xlu0 %1625
        %1627 = vrot.lane.b32.xlu0 %v1545, 15
        %v1628 = vpop.permute.xlu0 %1627
        %v1629 = vsel %vm505, %v1614, %v1622
        %v1630 = vsel %vm505, %v1616, %v1624
        %v1631 = vsel %vm505, %v1618, %v1626
        %v1632 = vsel %vm505, %v1620, %v1628
        %v1633 = vsel %vm505, %v1622, %v1614
        %v1634 = vsel %vm505, %v1624, %v1616
        %v1635 = vsel %vm505, %v1626, %v1618
        %v1636 = vsel %vm505, %v1628, %v1620
        %v1637 = vsel %vm1088, %v1633, 0.0
        %v1638 = vsel %vm1089, %v1629, 0.0
        %v1639 = vsel %vm1088, %v1634, 0.0
        %v1640 = vsel %vm1089, %v1630, 0.0
        %v1641 = vsel %vm1088, %v1635, 0.0
        %v1642 = vsel %vm1089, %v1631, 0.0
        %v1643 = vsel %vm1088, %v1636, 0.0
        %v1644 = vsel %vm1089, %v1632, 0.0
        %1645 = vrot.lane.b32.xlu0 %v1538, 1
        %v1646 = vpop.permute.xlu0 %1645
        %1647 = vrot.lane.b32.xlu0 %v1540, 1
        %v1648 = vpop.permute.xlu0 %1647
        %1649 = vrot.lane.b32.xlu0 %v1542, 1
        %v1650 = vpop.permute.xlu0 %1649
        %1651 = vrot.lane.b32.xlu0 %v1544, 1
        %v1652 = vpop.permute.xlu0 %1651
        %1653 = vrot.lane.b32.xlu0 %v1539, 1
        %v1654 = vpop.permute.xlu0 %1653
        %1655 = vrot.lane.b32.xlu0 %v1541, 1
        %v1656 = vpop.permute.xlu0 %1655
        %1657 = vrot.lane.b32.xlu0 %v1543, 1
        %v1658 = vpop.permute.xlu0 %1657
        %1659 = vrot.lane.b32.xlu0 %v1545, 1
        %v1660 = vpop.permute.xlu0 %1659
        %v1661 = vsel %vm514, %v1646, %v1654
        %v1662 = vsel %vm514, %v1648, %v1656
        %v1663 = vsel %vm514, %v1650, %v1658
        %v1664 = vsel %vm514, %v1652, %v1660
        %v1665 = vsel %vm514, %v1654, %v1646
        %v1666 = vsel %vm514, %v1656, %v1648
        %v1667 = vsel %vm514, %v1658, %v1650
        %v1668 = vsel %vm514, %v1660, %v1652
        %v1669 = vsel %vm1100, %v1665, 0.0
        %v1670 = vsel %vm1101, %v1661, 0.0
        %v1671 = vsel %vm1100, %v1666, 0.0
        %v1672 = vsel %vm1101, %v1662, 0.0
        %v1673 = vsel %vm1100, %v1667, 0.0
        %v1674 = vsel %vm1101, %v1663, 0.0
        %v1675 = vsel %vm1100, %v1668, 0.0
        %v1676 = vsel %vm1101, %v1664, 0.0
        %1677 = vrot.lane.b32.xlu0 %v1538, 127
        %v1678 = vpop.permute.xlu0 %1677
        %1679 = vrot.lane.b32.xlu0 %v1540, 127
        %v1680 = vpop.permute.xlu0 %1679
        %1681 = vrot.lane.b32.xlu0 %v1542, 127
        %v1682 = vpop.permute.xlu0 %1681
        %1683 = vrot.lane.b32.xlu0 %v1544, 127
        %v1684 = vpop.permute.xlu0 %1683
        %1685 = vrot.lane.b32.xlu0 %v1539, 127
        %v1686 = vpop.permute.xlu0 %1685
        %1687 = vrot.lane.b32.xlu0 %v1541, 127
        %v1688 = vpop.permute.xlu0 %1687
        %1689 = vrot.lane.b32.xlu0 %v1543, 127
        %v1690 = vpop.permute.xlu0 %1689
        %1691 = vrot.lane.b32.xlu0 %v1545, 127
        %v1692 = vpop.permute.xlu0 %1691
        %v1693 = vsel %vm523, %v1678, %v1686
        %v1694 = vsel %vm523, %v1680, %v1688
        %v1695 = vsel %vm523, %v1682, %v1690
        %v1696 = vsel %vm523, %v1684, %v1692
        %v1697 = vsel %vm523, %v1686, %v1678
        %v1698 = vsel %vm523, %v1688, %v1680
        %v1699 = vsel %vm523, %v1690, %v1682
        %v1700 = vsel %vm523, %v1692, %v1684
        %v1701 = vsel %vm1112, %v1693, 0.0
        %v1702 = vsel %vm1113, %v1697, 0.0
        %v1703 = vsel %vm1112, %v1694, 0.0
        %v1704 = vsel %vm1113, %v1698, 0.0
        %v1705 = vsel %vm1112, %v1695, 0.0
        %v1706 = vsel %vm1113, %v1699, 0.0
        %v1707 = vsel %vm1112, %v1696, 0.0
        %v1708 = vsel %vm1113, %v1700, 0.0
        %1709 = vrot.lane.b32.xlu0 %v1538, 113
        %v1710 = vpop.permute.xlu0 %1709
        %1711 = vrot.lane.b32.xlu0 %v1540, 113
        %v1712 = vpop.permute.xlu0 %1711
        %1713 = vrot.lane.b32.xlu0 %v1542, 113
        %v1714 = vpop.permute.xlu0 %1713
        %1715 = vrot.lane.b32.xlu0 %v1544, 113
        %v1716 = vpop.permute.xlu0 %1715
        %1717 = vrot.lane.b32.xlu0 %v1539, 113
        %v1718 = vpop.permute.xlu0 %1717
        %1719 = vrot.lane.b32.xlu0 %v1541, 113
        %v1720 = vpop.permute.xlu0 %1719
        %1721 = vrot.lane.b32.xlu0 %v1543, 113
        %v1722 = vpop.permute.xlu0 %1721
        %1723 = vrot.lane.b32.xlu0 %v1545, 113
        %v1724 = vpop.permute.xlu0 %1723
        %v1725 = vsel %vm532, %v1710, %v1718
        %v1726 = vsel %vm532, %v1712, %v1720
        %v1727 = vsel %vm532, %v1714, %v1722
        %v1728 = vsel %vm532, %v1716, %v1724
        %v1729 = vsel %vm532, %v1718, %v1710
        %v1730 = vsel %vm532, %v1720, %v1712
        %v1731 = vsel %vm532, %v1722, %v1714
        %v1732 = vsel %vm532, %v1724, %v1716
        %v1733 = vsel %vm1124, %v1725, 0.0
        %v1734 = vsel %vm1125, %v1729, 0.0
        %v1735 = vsel %vm1124, %v1726, 0.0
        %v1736 = vsel %vm1125, %v1730, 0.0
        %v1737 = vsel %vm1124, %v1727, 0.0
        %v1738 = vsel %vm1125, %v1731, 0.0
        %v1739 = vsel %vm1124, %v1728, 0.0
        %v1740 = vsel %vm1125, %v1732, 0.0
        %1741 = vrot.lane.b32.xlu0 %v1538, 112
        %v1742 = vpop.permute.xlu0 %1741
        %1743 = vrot.lane.b32.xlu0 %v1540, 112
        %v1744 = vpop.permute.xlu0 %1743
        %1745 = vrot.lane.b32.xlu0 %v1542, 112
        %v1746 = vpop.permute.xlu0 %1745
        %1747 = vrot.lane.b32.xlu0 %v1544, 112
        %v1748 = vpop.permute.xlu0 %1747
        %1749 = vrot.lane.b32.xlu0 %v1539, 112
        %v1750 = vpop.permute.xlu0 %1749
        %1751 = vrot.lane.b32.xlu0 %v1541, 112
        %v1752 = vpop.permute.xlu0 %1751
        %1753 = vrot.lane.b32.xlu0 %v1543, 112
        %v1754 = vpop.permute.xlu0 %1753
        %1755 = vrot.lane.b32.xlu0 %v1545, 112
        %v1756 = vpop.permute.xlu0 %1755
        %v1757 = vsel %vm541, %v1742, %v1750
        %v1758 = vsel %vm541, %v1744, %v1752
        %v1759 = vsel %vm541, %v1746, %v1754
        %v1760 = vsel %vm541, %v1748, %v1756
        %v1761 = vsel %vm541, %v1750, %v1742
        %v1762 = vsel %vm541, %v1752, %v1744
        %v1763 = vsel %vm541, %v1754, %v1746
        %v1764 = vsel %vm541, %v1756, %v1748
        %v1765 = vsel %vm1136, %v1757, 0.0
        %v1766 = vsel %vm1137, %v1761, 0.0
        %v1767 = vsel %vm1136, %v1758, 0.0
        %v1768 = vsel %vm1137, %v1762, 0.0
        %v1769 = vsel %vm1136, %v1759, 0.0
        %v1770 = vsel %vm1137, %v1763, 0.0
        %v1771 = vsel %vm1136, %v1760, 0.0
        %v1772 = vsel %vm1137, %v1764, 0.0
        %1773 = vrot.lane.b32.xlu0 %v1538, 111
        %v1774 = vpop.permute.xlu0 %1773
        %1775 = vrot.lane.b32.xlu0 %v1540, 111
        %v1776 = vpop.permute.xlu0 %1775
        %1777 = vrot.lane.b32.xlu0 %v1542, 111
        %v1778 = vpop.permute.xlu0 %1777
        %1779 = vrot.lane.b32.xlu0 %v1544, 111
        %v1780 = vpop.permute.xlu0 %1779
        %1781 = vrot.lane.b32.xlu0 %v1539, 111
        %v1782 = vpop.permute.xlu0 %1781
        %1783 = vrot.lane.b32.xlu0 %v1541, 111
        %v1784 = vpop.permute.xlu0 %1783
        %1785 = vrot.lane.b32.xlu0 %v1543, 111
        %v1786 = vpop.permute.xlu0 %1785
        %1787 = vrot.lane.b32.xlu0 %v1545, 111
        %v1788 = vpop.permute.xlu0 %1787
        %v1789 = vsel %vm550, %v1774, %v1782
        %v1790 = vsel %vm550, %v1776, %v1784
        %v1791 = vsel %vm550, %v1778, %v1786
        %v1792 = vsel %vm550, %v1780, %v1788
        %v1793 = vsel %vm550, %v1782, %v1774
        %v1794 = vsel %vm550, %v1784, %v1776
        %v1795 = vsel %vm550, %v1786, %v1778
        %v1796 = vsel %vm550, %v1788, %v1780
        %v1797 = vsel %vm1148, %v1789, 0.0
        %v1798 = vsel %vm1149, %v1793, 0.0
        %v1799 = vsel %vm1148, %v1790, 0.0
        %v1800 = vsel %vm1149, %v1794, 0.0
        %v1801 = vsel %vm1148, %v1791, 0.0
        %v1802 = vsel %vm1149, %v1795, 0.0
        %v1803 = vsel %vm1148, %v1792, 0.0
        %v1804 = vsel %vm1149, %v1796, 0.0
        %1806 = vset.pattern.permute.xlu0 0
        %1807 = vperm.xlu0 %1806, %v1548
        %v1808 = vpop.permute.xlu0 %1807
        %v1812 = vcombine.high %v1546, %v1546
        %vm1814 = vcmask 261120
        %v1815 = vsel %vm1814, %v1547, 0
        %1817 = vmatprep.subr.mxu0 %v1574
        %1818 = vmatpush1.msra.mxu0 %v1573
        %1819 = vmatprep.subr.mxu0 %v1576
        %1820 = vmatpush1.msra.mxu0 %v1575
        %1821 = vmatprep.subr.mxu0 %v1578
        %1822 = vmatpush1.msra.mxu0 %v1577
        %1823 = vmatprep.subr.mxu0 %v1580
        %1824 = vmatpush1.msra.mxu0 %v1579
        %1825 = vmatprep.subr.mxu0 %v1606
        %1826 = vmatpush1.msra.mxu0 %v1605
        %1827 = vmatprep.subr.mxu0 %v1608
        %1828 = vmatpush1.msra.mxu0 %v1607
        %1829 = vmatprep.subr.mxu0 %v1610
        %1830 = vmatpush1.msra.mxu0 %v1609
        %1831 = vmatprep.subr.mxu0 %v1612
        %1832 = vmatpush1.msra.mxu0 %v1611
        %1833 = vmatprep.subr.mxu0 %v1638
        %1834 = vmatpush1.msra.mxu0 %v1637
        %1835 = vmatprep.subr.mxu0 %v1640
        %1836 = vmatpush1.msra.mxu0 %v1639
        %1837 = vmatprep.subr.mxu0 %v1642
        %1838 = vmatpush1.msra.mxu0 %v1641
        %1839 = vmatprep.subr.mxu0 %v1644
        %1840 = vmatpush1.msra.mxu0 %v1643
        %1841 = vmatprep.subr.mxu0 %v1670
        %1842 = vmatpush1.msra.mxu0 %v1669
        %1843 = vmatprep.subr.mxu0 %v1672
        %1844 = vmatpush1.msra.mxu0 %v1671
        %1845 = vmatprep.subr.mxu0 %v1674
        %1846 = vmatpush1.msra.mxu0 %v1673
        %1847 = vmatprep.subr.mxu0 %v1676
        %1848 = vmatpush1.msra.mxu0 %v1675
        %1849 = vmatprep.subr.mxu0 %v1539
        %1850 = vmatpush1.msra.mxu0 %v1538
        %1851 = vmatprep.subr.mxu0 %v1541
        %1852 = vmatpush1.msra.mxu0 %v1540
        %1853 = vmatprep.subr.mxu0 %v1543
        %1854 = vmatpush1.msra.mxu0 %v1542
        %1855 = vmatprep.subr.mxu0 %v1545
        %1856 = vmatpush1.msra.mxu0 %v1544
        %1857 = vmatprep.subr.mxu0 %v1702
        %1858 = vmatpush1.msra.mxu0 %v1701
        %1859 = vmatprep.subr.mxu0 %v1704
        %1860 = vmatpush1.msra.mxu0 %v1703
        %1861 = vmatprep.subr.mxu0 %v1706
        %1862 = vmatpush1.msra.mxu0 %v1705
        %1863 = vmatprep.subr.mxu0 %v1708
        %1864 = vmatpush1.msra.mxu0 %v1707
        %1865 = vmatprep.subr.mxu0 %v1734
        %1866 = vmatpush1.msra.mxu0 %v1733
        %1867 = vmatprep.subr.mxu0 %v1736
        %1868 = vmatpush1.msra.mxu0 %v1735
        %1869 = vmatprep.subr.mxu0 %v1738
        %1870 = vmatpush1.msra.mxu0 %v1737
        %1871 = vmatprep.subr.mxu0 %v1740
        %1872 = vmatpush1.msra.mxu0 %v1739
        %1873 = vmatprep.subr.mxu0 %v1766
        %1874 = vmatpush1.msra.mxu0 %v1765
        %1875 = vmatprep.subr.mxu0 %v1768
        %1876 = vmatpush1.msra.mxu0 %v1767
        %1877 = vmatprep.subr.mxu0 %v1770
        %1878 = vmatpush1.msra.mxu0 %v1769
        %1879 = vmatprep.subr.mxu0 %v1772
        %1880 = vmatpush1.msra.mxu0 %v1771
        %1881 = vmatprep.mubr.f32.mxu0 %v1812
        %1882 = vmatmul.mubr.f32.gmra.mrb[0].mxu0 %v1546
        %v1883 = vpop.f32.mrb[0].mxu0
        %v1884 = vadd.f32 %v1808, %v1883
        %v1885 = vpop.f32.mrb[0].mxu0
        %v1886 = vadd.f32 %v1808, %v1885
        %1887 = vdwg.mxu0
        %1888 = vmatprep.subr.mxu0 %v1798
        %1889 = vmatpush1.msra.mxu0 %v1797
        %1890 = vmatprep.subr.mxu0 %v1800
        %1891 = vmatpush1.msra.mxu0 %v1799
        %1892 = vmatprep.subr.mxu0 %v1802
        %1893 = vmatpush1.msra.mxu0 %v1801
        %1894 = vmatprep.subr.mxu0 %v1804
        %1895 = vmatpush1.msra.mxu0 %v1803
        %1896 = vmatprep.subr.mxu0 0.0
        %1897 = vmatpush1.msra.mxu0 0.0
        %1898 = vmatprep.subr.mxu0 0.0
        %1899 = vmatpush1.msra.mxu0 0.0
        %1900 = vmatprep.subr.mxu0 0.0
        %1901 = vmatpush1.msra.mxu0 0.0
        %1902 = vmatprep.subr.mxu0 0.0
        %1903 = vmatpush1.msra.mxu0 0.0
        %1904 = vmatprep.subr.mxu0 0.0
        %1905 = vmatpush1.msra.mxu0 0.0
        %1906 = vmatprep.subr.mxu0 0.0
        %1907 = vmatpush1.msra.mxu0 0.0
        %1908 = vmatprep.subr.mxu0 0.0
        %1909 = vmatpush1.msra.mxu0 0.0
        %1910 = vmatprep.subr.mxu0 0.0
        %1911 = vmatpush1.msra.mxu0 0.0
        %1912 = vmatprep.subr.mxu0 0.0
        %1913 = vmatpush1.msra.mxu0 0.0
        %1914 = vmatprep.subr.mxu0 0.0
        %1915 = vmatpush1.msra.mxu0 0.0
        %1916 = vmatprep.subr.mxu0 0.0
        %1917 = vmatpush1.msra.mxu0 0.0
        %1918 = vmatprep.subr.mxu0 0.0
        %1919 = vmatpush1.msra.mxu0 0.0
        %1920 = vmatprep.subr.mxu0 0.0
        %1921 = vmatpush1.msra.mxu0 0.0
        %1922 = vmatprep.subr.mxu0 0.0
        %1923 = vmatpush1.msra.mxu0 0.0
        %1924 = vmatprep.subr.mxu0 0.0
        %1925 = vmatpush1.msra.mxu0 0.0
        %1926 = vmatprep.subr.mxu0 0.0
        %1927 = vmatpush1.msra.mxu0 0.0
        %1928 = vmatprep.subr.mxu0 0.0
        %1929 = vmatpush1.msra.mxu0 0.0
        %1930 = vmatprep.subr.mxu0 0.0
        %1931 = vmatpush1.msra.mxu0 0.0
        %1932 = vmatprep.subr.mxu0 0.0
        %1933 = vmatpush1.msra.mxu0 0.0
        %1934 = vmatprep.subr.mxu0 0.0
        %1935 = vmatpush1.msra.mxu0 0.0
        %1936 = vmatprep.subr.mxu0 0.0
        %1937 = vmatpush1.msra.mxu0 0.0
        %1938 = vmatprep.subr.mxu0 0.0
        %1939 = vmatpush1.msra.mxu0 0.0
        %1940 = vmatprep.subr.mxu0 0.0
        %1941 = vmatpush1.msra.mxu0 0.0
        %1942 = vmatprep.subr.mxu0 0.0
        %1943 = vmatpush1.msra.mxu0 0.0
        %1944 = vmatprep.subr.mxu0 0.0
        %1945 = vmatpush1.msra.mxu0 0.0
        %1946 = vmatprep.subr.mxu0 0.0
        %1947 = vmatpush1.msra.mxu0 0.0
        %1948 = vmatprep.subr.mxu0 0.0
        %1949 = vmatpush1.msra.mxu0 0.0
        %1950 = vmatprep.subr.mxu0 0.0
        %1951 = vmatpush1.msra.mxu0 0.0
        %1952 = vmatprep.mubr.f32.mxu0 0.0
        %1953 = vmatmul.mubr.f32.gmra.mrb[0].mxu0 %v1815
        %v1954 = vpop.f32.mrb[0].mxu0
        %v1955 = vadd.f32 %v1884, %v1954
        %v1956 = vpop.f32.mrb[0].mxu0
        %v1957 = vadd.f32 %v1886, %v1956
        %1958 = vdwg.mxu0
        %v1961 = vcombine.low %v1955, %v1957
        %1963 = vst [vmem:[%s424] sm:$0xff] %v1961
        %p1964 = scmp.lt.s32.totalorder %s24, 1
        %s1965 = scalar_select %p1964, %s24, 1
        %s1966 = smul.addr %s1965, 2
        %s1967 = smul.addr %s1966, 4
        %s1968 = scalar_lea.vmem %s12, %s1967
        // Predicated region
        $region80: #{srgan_forward_pallas.1} parent=67 // pred_check
          %p1969 = pneg %p299
        $region81: #{srgan_forward_pallas.1} parent=67 // pred_check_branch
          %1971 = sbr.rel (%p1969) target = $region83
        $region82: #{srgan_forward_pallas.1} parent=67 // pred_region
          _
        $region83: #{srgan_forward_pallas.1} parent=67 // pred_fallthru
          _
      $region68: #{srgan_forward_pallas.1} parent=5 // pred_fallthru
        _
      %p1972 = scmp.le.s32.totalorder 2, %s19
      // Predicated region
      $region84: #{srgan_forward_pallas.1} parent=5 // pred_check
        %p1973 = pneg %p1972
      $region85: #{srgan_forward_pallas.1} parent=5 // pred_check_branch
        %1975 = sbr.rel (%p1973) target = $region87
      $region86: #{srgan_forward_pallas.1} parent=5 // pred_region
        %s1976 = ssub.s32 %s19, 2
        // Predicated region
        $region88: #{srgan_forward_pallas.1} parent=86 // pred_check
          %p1977 = pneg %p305
        $region89: #{srgan_forward_pallas.1} parent=86 // pred_check_branch
          %1979 = sbr.rel (%p1977) target = $region91
        $region90: #{srgan_forward_pallas.1} parent=86 // pred_region
          %p1980 = scmp.lt.s32.totalorder %s25, 1
          %s1981 = scalar_select %p1980, %s25, 1
          %s1982 = smul.addr %s1981, 2
          %s1983 = smul.addr %s1982, 4
          %s1984 = scalar_lea.vmem %s12, %s1983
        $region91: #{srgan_forward_pallas.1} parent=86 // pred_fallthru
          _
      $region87: #{srgan_forward_pallas.1} parent=5 // pred_fallthru
        _
    $region6: #{srgan_forward_pallas.1} parent=1 // loop_footer
      %s23 = sadd.s32 1, %s19
    $region7: #{srgan_forward_pallas.1} parent=1 // loop_footer_branch
      %18 = sbr.rel target = $region3
    $region8: #{srgan_forward_pallas.1} parent=1 // loop_exit
      _
    %1985 = vsyncpa [#allocation3], 1
    %s1986 = scalar_lea.sflag [#allocation3], 1
    %1987 = vsyncpa %s1986, 1

</llo_original>
